<compile_context>
chip_gen: v5e
topology: v5e:2x2
jax: 0.10.0
libtpu: 0.0.40
codegen_flags: <defaults>
</compile_context>

<pallas_src>
import functools
import math

import jax
import jax.numpy as jnp
from jax import lax
from jax.experimental import pallas as pl
from jax.experimental.pallas import tpu as pltpu

# Keep host-side reference matmuls at full f32 precision so the comparison
# against the in-kernel MXU matmuls is meaningful.
jax.config.update("jax_default_matmul_precision", "highest")

_EPS = 1e-5            # torch.nn.BatchNorm2d default
_NEG_SLOPE = 0.01      # torch.nn.LeakyReLU default


def _leaky_relu(v):
    return jnp.where(v >= 0, v, _NEG_SLOPE * v)


def _vmem_limit_bytes():
    """Generation-aware scoped-VMEM budget (half of physical, capped)."""
    try:
        phys = int(pltpu.get_tpu_info().vmem_capacity_bytes)
    except Exception:
        phys = 64 * 1024 * 1024          # conservative fallback (v7x per-TC)
    return max(16 * 1024 * 1024, min(phys // 2, 96 * 1024 * 1024))


def _derive_tile_n(n, cin, cout, vmem_limit_bytes):
    """Largest lane-dense spatial tile that fits the double-buffered budget."""
    per_lane = 2 * 4 * (cin + cout)          # 2 buffers * 4 B * (x cols + out cols)
    budget = (vmem_limit_bytes * 3) // 4     # headroom for weights / params / accums
    cap = max(128, (budget // per_lane) // 128 * 128)
    if n <= cap:
        return n                             # full-row block (always legal)
    t = cap
    while t >= 128:
        if n % t == 0:
            return t
        t -= 128
    raise ValueError(
        f"H*W={n} has no 128-multiple tile <= VMEM-derived cap {cap}; pad the "
        f"spatial dims to a multiple of 128 or pass tile_n explicitly.")


def _pick_outer(n_tiles):
    """Split the spatial reduction into parallel outer chunks (v7x 2-TC balance)."""
    for c in (4, 2):
        if n_tiles % c == 0:
            return c
    return 1


# ----------------------------------------------------------------------------
# Pass 1: per-(batch, outer-chunk) Gram statistics of x.
#   G = x_tile @ x_tile^T  (Cin, Cin),  r = rowsum(x_tile)  (Cin, 1)
# W / BN do not appear -> fully parallel over batch and outer chunks; the
# inner (arbitrary) axis accumulates into the resident output block.
# Optionally emits a lane-dense bf16 copy of x for passes 2-3.
# ----------------------------------------------------------------------------
def _gram_kernel(x_ref, g_ref, r_ref, xcopy_ref=None):
    ni = pl.program_id(2)

    @pl.when(ni == 0)
    def _init():
        g_ref[...] = jnp.zeros_like(g_ref)
        r_ref[...] = jnp.zeros_like(r_ref)

    xt = x_ref[0]                                           # (Cin, tn) f32
    gram = lax.dot_general(xt, xt, (((1,), (1,)), ((), ())),
                           preferred_element_type=jnp.float32)   # (Cin, Cin)
    g_ref[...] += gram[None, None]
    r_ref[...] += jnp.sum(xt, axis=1, keepdims=True)[None, None]

    if xcopy_ref is not None:
        xcopy_ref[...] = x_ref[...].astype(jnp.bfloat16)


# ----------------------------------------------------------------------------
# Pass 2: per-(batch, outer-chunk) sum / sumsq of a = LeakyReLU(BN1(W x)).
# ----------------------------------------------------------------------------
def _batch_stats_kernel(x_ref, w_ref, s1_ref, t1_ref, sum_ref, sumsq_ref):
    ni = pl.program_id(2)

    @pl.when(ni == 0)
    def _init():
        sum_ref[...] = jnp.zeros_like(sum_ref)
        sumsq_ref[...] = jnp.zeros_like(sumsq_ref)

    xt = x_ref[0].astype(jnp.float32)
    y = jnp.dot(w_ref[...], xt, preferred_element_type=jnp.float32)
    a = _leaky_relu(y * s1_ref[...] + t1_ref[...])          # (Cout, tn)
    sum_ref[...] += jnp.sum(a, axis=1, keepdims=True)[None, None]
    sumsq_ref[...] += jnp.sum(a * a, axis=1, keepdims=True)[None, None]


# ----------------------------------------------------------------------------
# Pass 3: produce the output tile-by-tile (fully parallel grid).
# ----------------------------------------------------------------------------
def _apply_kernel(x_ref, w_ref, s1_ref, t1_ref, s2_ref, t2_ref, o_ref):
    xt = x_ref[0].astype(jnp.float32)
    y = jnp.dot(w_ref[...], xt, preferred_element_type=jnp.float32)
    a = _leaky_relu(y * s1_ref[...] + t1_ref[...])          # LeakyReLU(BN1(conv(x)))
    z = a * s2_ref[0] + t2_ref[...]                         # SE scale + folded BN2
    o_ref[...] = _leaky_relu(z)[None]


# ----------------------------------------------------------------------------
def conv2d_channel_forward(x, params, tile_n=None, use_bf16_x=False):
    """x: NCHW float32 -> NCHW float32 of shape (B, Cout, H, W)."""
    B, Cin, H, W = x.shape
    N = H * W
    w = params["conv_w"]                       # (Cout, Cin)
    Cout = w.shape[0]

    vmem_limit = _vmem_limit_bytes()
    tn = tile_n if tile_n is not None else _derive_tile_n(N, Cin, Cout, vmem_limit)
    if N % tn != 0:
        raise ValueError(f"tile_n={tn} must divide H*W={N}")
    n_tiles = N // tn
    n_outer = _pick_outer(n_tiles)
    n_inner = n_tiles // n_outer
    m_total = float(B * N)

    x3 = x.reshape(B, Cin, N)                  # NCHW -> channel-major (metadata-only)

    x_bytes_f32 = 4 * B * Cin * N
    x_bytes_stream = (2 if use_bf16_x else 4) * B * Cin * N
    out_bytes = 4 * B * Cout * N
    mm_flops = 2 * B * N * Cin * Cout

    # ---- pass 1: Gram statistics of x (+ optional bf16 x copy) --------------
    stat_grid = (B, n_outer, n_inner)
    x_spec_s = pl.BlockSpec((1, Cin, tn),
                            lambda b, no, ni: (b, 0, no * n_inner + ni))
    g_spec = pl.BlockSpec((1, 1, Cin, Cin), lambda b, no, ni: (b, no, 0, 0))
    r_spec = pl.BlockSpec((1, 1, Cin, 1), lambda b, no, ni: (b, no, 0, 0))

    p1_out_specs = (g_spec, r_spec)
    p1_out_shape = (jax.ShapeDtypeStruct((B, n_outer, Cin, Cin), jnp.float32),
                    jax.ShapeDtypeStruct((B, n_outer, Cin, 1), jnp.float32))
    p1_bytes = x_bytes_f32
    if use_bf16_x:
        p1_out_specs += (pl.BlockSpec(
            (1, Cin, tn), lambda b, no, ni: (b, 0, no * n_inner + ni)),)
        p1_out_shape += (jax.ShapeDtypeStruct((B, Cin, N), jnp.bfloat16),)
        p1_bytes += 2 * B * Cin * N

    p1 = pl.pallas_call(
        _gram_kernel,
        grid=stat_grid,
        in_specs=[x_spec_s],
        out_specs=p1_out_specs,
        out_shape=p1_out_shape,
        compiler_params=pltpu.CompilerParams(
            dimension_semantics=("parallel", "parallel", "arbitrary"),
            vmem_limit_bytes=vmem_limit),
        cost_estimate=pl.CostEstimate(flops=2 * B * N * Cin * Cin + B * N * Cin,
                                      transcendentals=0,
                                      bytes_accessed=p1_bytes),
    )(x3)
    if use_bf16_x:
        g_part, r_part, x_stream = p1
    else:
        g_part, r_part = p1
        x_stream = x3

    # ---- fold 1 (plain JAX, tiny): BN1 scale / shift per channel ------------
    # sum(y) = W r, sum(y^2) = diag(W G W^T); conv bias omitted (training-mode
    # BatchNorm subtracts the batch mean, so the bias cancels exactly).
    g_tot = jnp.sum(g_part, axis=(0, 1))                       # (Cin, Cin)
    r_tot = jnp.sum(r_part, axis=(0, 1))                       # (Cin, 1)
    sum_y = jnp.dot(w, r_tot)                                  # (Cout, 1)
    sumsq_y = jnp.sum(jnp.dot(w, g_tot) * w, axis=1, keepdims=True)
    mean1 = sum_y / m_total
    var1 = sumsq_y / m_total - mean1 * mean1                   # biased variance
    bn1_scale = params["bn1_gamma"].reshape(Cout, 1) * lax.rsqrt(var1 + _EPS)
    bn1_shift = params["bn1_beta"].reshape(Cout, 1) - mean1 * bn1_scale

    # ---- pass 2: per-(batch, chunk) sums of a --------------------------------
    w_spec_s = pl.BlockSpec((Cout, Cin), lambda b, no, ni: (0, 0))   # loaded once
    ch_spec_s = pl.BlockSpec((Cout, 1), lambda b, no, ni: (0, 0))    # loaded once
    bsum_spec = pl.BlockSpec((1, 1, Cout, 1), lambda b, no, ni: (b, no, 0, 0))

    sum_part, sumsq_part = pl.pallas_call(
        _batch_stats_kernel,
        grid=stat_grid,
        in_specs=[x_spec_s, w_spec_s, ch_spec_s, ch_spec_s],
        out_specs=(bsum_spec, bsum_spec),
        out_shape=(jax.ShapeDtypeStruct((B, n_outer, Cout, 1), jnp.float32),
                   jax.ShapeDtypeStruct((B, n_outer, Cout, 1), jnp.float32)),
        compiler_params=pltpu.CompilerParams(
            dimension_semantics=("parallel", "parallel", "arbitrary"),
            vmem_limit_bytes=vmem_limit),
        cost_estimate=pl.CostEstimate(flops=mm_flops + 7 * B * N * Cout,
                                      transcendentals=0,
                                      bytes_accessed=x_bytes_stream),
    )(x_stream, w, bn1_scale, bn1_shift)

    # ---- fold 2 (plain JAX, tiny): SE excitation + analytic BN2 fold --------
    sum_a = jnp.sum(sum_part, axis=1).reshape(B, Cout)
    sumsq_a = jnp.sum(sumsq_part, axis=1).reshape(B, Cout)
    pooled = sum_a / float(N)                                    # adaptive avg pool
    h = _leaky_relu(jnp.dot(pooled, params["fc1_wt"]) + params["fc1_b"])
    s = jax.nn.sigmoid(jnp.dot(h, params["fc2_wt"]) + params["fc2_b"])   # (B, Cout)
    mean2 = jnp.sum(s * sum_a, axis=0) / m_total                 # (Cout,)
    ex2 = jnp.sum((s * s) * sumsq_a, axis=0) / m_total
    var2 = ex2 - mean2 * mean2
    g_r = params["bn2_gamma"] * lax.rsqrt(var2 + _EPS)           # gamma2 * rstd2
    se_scale = (s * g_r).reshape(B, Cout, 1)                     # per (batch, chan)
    se_shift = (params["bn2_beta"] - mean2 * g_r).reshape(Cout, 1)

    # ---- pass 3: final output, tile by tile (fully parallel) -----------------
    apply_grid = (B, n_tiles)
    x_spec_a = pl.BlockSpec((1, Cin, tn), lambda b, n: (b, 0, n))
    w_spec_a = pl.BlockSpec((Cout, Cin), lambda b, n: (0, 0))
    ch_spec_a = pl.BlockSpec((Cout, 1), lambda b, n: (0, 0))
    s2_spec = pl.BlockSpec((1, Cout, 1), lambda b, n: (b, 0, 0))

    out3 = pl.pallas_call(
        _apply_kernel,
        grid=apply_grid,
        in_specs=[x_spec_a, w_spec_a, ch_spec_a, ch_spec_a, s2_spec, ch_spec_a],
        out_specs=pl.BlockSpec((1, Cout, tn), lambda b, n: (b, 0, n)),
        out_shape=jax.ShapeDtypeStruct((B, Cout, N), jnp.float32),
        compiler_params=pltpu.CompilerParams(
            dimension_semantics=("parallel", "parallel"),
            vmem_limit_bytes=vmem_limit),
        cost_estimate=pl.CostEstimate(flops=mm_flops + 8 * B * N * Cout,
                                      transcendentals=0,
                                      bytes_accessed=x_bytes_stream + out_bytes),
    )(x_stream, w, bn1_scale, bn1_shift, se_scale, se_shift)

    return out3.reshape(B, Cout, H, W)         # metadata-only reshape back to NCHW


# ----------------------------------------------------------------------------
# Pure-JAX reference (direct transcription of the PyTorch forward).
# ----------------------------------------------------------------------------
def conv2d_channel_reference(x, params):
    y = jnp.einsum("bchw,oc->bohw", x, params["conv_w"],
                   precision=lax.Precision.HIGHEST)
    y = y + params["conv_b"][None, :, None, None]

    def bn(t, gamma, beta):
        mean = t.mean(axis=(0, 2, 3), keepdims=True)
        var = t.var(axis=(0, 2, 3), keepdims=True)      # biased: training mode
        t = (t - mean) / jnp.sqrt(var + _EPS)
        return t * gamma.reshape(1, -1, 1, 1) + beta.reshape(1, -1, 1, 1)

    a = _leaky_relu(bn(y, params["bn1_gamma"], params["bn1_beta"]))
    pooled = a.mean(axis=(2, 3))                                        # (B, Cout)
    h = _leaky_relu(jnp.dot(pooled, params["fc1_wt"],
                            precision=lax.Precision.HIGHEST) + params["fc1_b"])
    s = jax.nn.sigmoid(jnp.dot(h, params["fc2_wt"],
                               precision=lax.Precision.HIGHEST) + params["fc2_b"])
    z = a * s[:, :, None, None]
    return _leaky_relu(bn(z, params["bn2_gamma"], params["bn2_beta"]))


# ----------------------------------------------------------------------------
def init_params(key, num_in_filters, num_out_filters, reduction_ratio=8):
    c_red = max(1, num_out_filters // reduction_ratio)
    ks = jax.random.split(key, 10)

    def uniform(k, shape, fan_in):
        bound = 1.0 / math.sqrt(fan_in)
        return jax.random.uniform(k, shape, jnp.float32, -bound, bound)

    return {
        # Conv2d 1x1.  Bias is kept for the reference only: the Pallas path
        # drops it because training-mode BatchNorm cancels it exactly.
        "conv_w": uniform(ks[0], (num_out_filters, num_in_filters), num_in_filters),
        "conv_b": uniform(ks[1], (num_out_filters,), num_in_filters),
        # BatchNorm params (perturbed from ones/zeros so the check is non-trivial).
        "bn1_gamma": 1.0 + 0.1 * jax.random.normal(ks[2], (num_out_filters,), jnp.float32),
        "bn1_beta": 0.1 * jax.random.normal(ks[3], (num_out_filters,), jnp.float32),
        "bn2_gamma": 1.0 + 0.1 * jax.random.normal(ks[4], (num_out_filters,), jnp.float32),
        "bn2_beta": 0.1 * jax.random.normal(ks[5], (num_out_filters,), jnp.float32),
        # ChannelSELayer fc weights, stored pre-transposed as (in, out).
        "fc1_wt": uniform(ks[6], (num_out_filters, c_red), num_out_filters),
        "fc1_b": uniform(ks[7], (c_red,), num_out_filters),
        "fc2_wt": uniform(ks[8], (c_red, num_out_filters), c_red),
        "fc2_b": uniform(ks[9], (num_out_filters,), c_red),
    }


if __name__ == "__main__":
    B, Cin, Cout, H, W = 2, 4, 16, 16, 16       # Cout // 8 == 2 for the SE block
    key = jax.random.PRNGKey(0)
    kx, kp = jax.random.split(key)
    x = jax.random.normal(kx, (B, Cin, H, W), jnp.float32)
    params = init_params(kp, Cin, Cout)

    ref = jax.block_until_ready(conv2d_channel_reference(x, params))

    # Default path: VMEM-budget-derived tile (full row at this small shape).
    fwd = jax.jit(conv2d_channel_forward)
    out = jax.block_until_ready(fwd(x, params))
    assert out.shape == (B, Cout, H, W)
    err = float(jnp.max(jnp.abs(out - ref)))
    assert err < 1e-3, f"default path mismatch vs reference: max abs err {err}"

    # Small-tile path: exercises cross-tile accumulation and the parallel
    # outer spatial split (grid (B, 2, 1) for the stat passes).
    fwd_tiled = jax.jit(functools.partial(conv2d_channel_forward, tile_n=128))
    out_t = jax.block_until_ready(fwd_tiled(x, params))
    err_t = float(jnp.max(jnp.abs(out_t - ref)))
    assert err_t < 1e-3, f"tiled path mismatch vs reference: max abs err {err_t}"

    # bf16 x-stream path: pass 1 emits a bf16 copy of x that passes 2-3 read.
    fwd_bf16 = jax.jit(functools.partial(conv2d_channel_forward,
                                         tile_n=128, use_bf16_x=True))
    out_b = jax.block_until_ready(fwd_bf16(x, params))
    err_b = float(jnp.max(jnp.abs(out_b - ref)))
    assert err_b < 5e-2, f"bf16 path mismatch vs reference: max abs err {err_b}"

    print("KERNEL_OK")
</pallas_src>

<mosaic_0001>
module attributes {stable_mosaic.version = 11 : i64} {
  func.func @_gram_kernel(%arg0: i32, %arg1: i32, %arg2: i32, %arg3: memref<1x4x256xf32, #tpu.memory_space<vmem>>, %arg4: memref<1x1x4x4xf32, #tpu.memory_space<vmem>>, %arg5: memref<1x1x4x1xf32, #tpu.memory_space<vmem>>) attributes {dimension_semantics = [#tpu.dimension_semantics<parallel>, #tpu.dimension_semantics<parallel>, #tpu.dimension_semantics<arbitrary>], iteration_bounds = array<i64: 2, 1, 1>, scalar_prefetch = 0 : i64, scratch_operands = 0 : i64, tpu.core_type = #tpu.core_type<tc>, window_params = [{transform_indices = @transform_0, window_bounds = array<i64: 1, 4, 256>}, {transform_indices = @transform_1, window_bounds = array<i64: 1, 1, 4, 4>}, {transform_indices = @transform_2, window_bounds = array<i64: 1, 1, 4, 1>}]} {
    %c0_i32 = arith.constant 0 : i32
    %0 = arith.cmpi eq, %arg2, %c0_i32 : i32
    %1 = arith.extui %0 : i1 to i32
    %c0_i32_0 = arith.constant 0 : i32
    %2 = arith.cmpi ne, %1, %c0_i32_0 : i32
    scf.if %2 {
      %cst_20 = arith.constant 0.000000e+00 : f32
      %16 = vector.broadcast %cst_20 : f32 to vector<1x1x4x4xf32>
      %c0_21 = arith.constant 0 : index
      %c0_22 = arith.constant 0 : index
      %c0_23 = arith.constant 0 : index
      %c0_24 = arith.constant 0 : index
      %17 = vector.load %arg4[%c0_21, %c0_22, %c0_23, %c0_24] : memref<1x1x4x4xf32, #tpu.memory_space<vmem>>, vector<1x1x4x4xf32>
      tpu.vector_store %arg4[%c0_21, %c0_22, %c0_23, %c0_24], %16 {strides = array<i32>} : memref<1x1x4x4xf32, #tpu.memory_space<vmem>>, vector<1x1x4x4xf32>,
      %cst_25 = arith.constant 0.000000e+00 : f32
      %18 = vector.broadcast %cst_25 : f32 to vector<1x1x4x1xf32>
      %c0_26 = arith.constant 0 : index
      %c0_27 = arith.constant 0 : index
      %c0_28 = arith.constant 0 : index
      %c0_29 = arith.constant 0 : index
      %19 = vector.load %arg5[%c0_26, %c0_27, %c0_28, %c0_29] : memref<1x1x4x1xf32, #tpu.memory_space<vmem>>, vector<1x1x4x1xf32>
      tpu.vector_store %arg5[%c0_26, %c0_27, %c0_28, %c0_29], %18 {strides = array<i32>} : memref<1x1x4x1xf32, #tpu.memory_space<vmem>>, vector<1x1x4x1xf32>,
    } else {
    }
    %c0 = arith.constant 0 : index
    %c0_1 = arith.constant 0 : index
    %c0_2 = arith.constant 0 : index
    %3 = vector.load %arg3[%c0, %c0_1, %c0_2] : memref<1x4x256xf32, #tpu.memory_space<vmem>>, vector<1x4x256xf32>
    %4 = vector.shape_cast %3 : vector<1x4x256xf32> to vector<4x256xf32>
    %cst = arith.constant dense<0.000000e+00> : vector<4x4xf32>
    %5 = tpu.matmul %4, %4, %cst {dimension_numbers = #tpu.dot_dimension_numbers<[1], [1], [0], [0], [0, 0, 1, 0], [], []>, precision = #tpu.contract_precision<fp32>} : vector<4x256xf32>, vector<4x256xf32>, vector<4x4xf32> -> vector<4x4xf32>
    %c0_3 = arith.constant 0 : index
    %c0_4 = arith.constant 0 : index
    %c0_5 = arith.constant 0 : index
    %c0_6 = arith.constant 0 : index
    %6 = vector.load %arg4[%c0_3, %c0_4, %c0_5, %c0_6] : memref<1x1x4x4xf32, #tpu.memory_space<vmem>>, vector<1x1x4x4xf32>
    %7 = vector.shape_cast %5 : vector<4x4xf32> to vector<1x1x4x4xf32>
    %8 = arith.addf %6, %7 : vector<1x1x4x4xf32>
    %c0_7 = arith.constant 0 : index
    %c0_8 = arith.constant 0 : index
    %c0_9 = arith.constant 0 : index
    %c0_10 = arith.constant 0 : index
    %9 = vector.load %arg4[%c0_7, %c0_8, %c0_9, %c0_10] : memref<1x1x4x4xf32, #tpu.memory_space<vmem>>, vector<1x1x4x4xf32>
    tpu.vector_store %arg4[%c0_7, %c0_8, %c0_9, %c0_10], %8 {strides = array<i32>} : memref<1x1x4x4xf32, #tpu.memory_space<vmem>>, vector<1x1x4x4xf32>,
    %c0_11 = arith.constant 0 : index
    %c0_12 = arith.constant 0 : index
    %c0_13 = arith.constant 0 : index
    %c0_14 = arith.constant 0 : index
    %10 = vector.load %arg5[%c0_11, %c0_12, %c0_13, %c0_14] : memref<1x1x4x1xf32, #tpu.memory_space<vmem>>, vector<1x1x4x1xf32>
    %cst_15 = arith.constant dense<0.000000e+00> : vector<4xf32>
    %11 = vector.multi_reduction <add>, %4, %cst_15 [1] : vector<4x256xf32> to vector<4xf32>
    %12 = vector.shape_cast %11 : vector<4xf32> to vector<4x1xf32>
    %13 = vector.shape_cast %12 : vector<4x1xf32> to vector<1x1x4x1xf32>
    %14 = arith.addf %10, %13 : vector<1x1x4x1xf32>
    %c0_16 = arith.constant 0 : index
    %c0_17 = arith.constant 0 : index
    %c0_18 = arith.constant 0 : index
    %c0_19 = arith.constant 0 : index
    %15 = vector.load %arg5[%c0_16, %c0_17, %c0_18, %c0_19] : memref<1x1x4x1xf32, #tpu.memory_space<vmem>>, vector<1x1x4x1xf32>
    tpu.vector_store %arg5[%c0_16, %c0_17, %c0_18, %c0_19], %14 {strides = array<i32>} : memref<1x1x4x1xf32, #tpu.memory_space<vmem>>, vector<1x1x4x1xf32>,
    return
  }
  func.func @transform_0(%arg0: i32, %arg1: i32, %arg2: i32) -> (i32, i32, i32) {
    %c1_i32 = arith.constant 1 : i32
    %0 = arith.muli %arg1, %c1_i32 : i32
    %1 = arith.addi %0, %arg2 : i32
    %c0_i32 = arith.constant 0 : i32
    %c0_i32_0 = arith.constant 0 : i32
    return %arg0, %c0_i32, %1 : i32, i32, i32
  }
  func.func @transform_1(%arg0: i32, %arg1: i32, %arg2: i32) -> (i32, i32, i32, i32) {
    %c0_i32 = arith.constant 0 : i32
    %c0_i32_0 = arith.constant 0 : i32
    %c0_i32_1 = arith.constant 0 : i32
    return %arg0, %arg1, %c0_i32, %c0_i32_0 : i32, i32, i32, i32
  }
  func.func @transform_2(%arg0: i32, %arg1: i32, %arg2: i32) -> (i32, i32, i32, i32) {
    %c0_i32 = arith.constant 0 : i32
    %c0_i32_0 = arith.constant 0 : i32
    %c0_i32_1 = arith.constant 0 : i32
    return %arg0, %arg1, %c0_i32, %c0_i32_0 : i32, i32, i32, i32
  }
}

module attributes {stable_mosaic.version = 11 : i64} {
  func.func @_batch_stats_kernel(%arg0: i32, %arg1: i32, %arg2: i32, %arg3: memref<1x4x256xf32, #tpu.memory_space<vmem>>, %arg4: memref<16x4xf32, #tpu.memory_space<vmem>>, %arg5: memref<16x1xf32, #tpu.memory_space<vmem>>, %arg6: memref<16x1xf32, #tpu.memory_space<vmem>>, %arg7: memref<1x1x16x1xf32, #tpu.memory_space<vmem>>, %arg8: memref<1x1x16x1xf32, #tpu.memory_space<vmem>>) attributes {dimension_semantics = [#tpu.dimension_semantics<parallel>, #tpu.dimension_semantics<parallel>, #tpu.dimension_semantics<arbitrary>], iteration_bounds = array<i64: 2, 1, 1>, scalar_prefetch = 0 : i64, scratch_operands = 0 : i64, tpu.core_type = #tpu.core_type<tc>, window_params = [{transform_indices = @transform_0, window_bounds = array<i64: 1, 4, 256>}, {pipeline_mode = #tpu.pipeline_mode<synchronous>, transform_indices = @transform_1, window_bounds = array<i64: 16, 4>}, {pipeline_mode = #tpu.pipeline_mode<synchronous>, transform_indices = @transform_2, window_bounds = array<i64: 16, 1>}, {pipeline_mode = #tpu.pipeline_mode<synchronous>, transform_indices = @transform_3, window_bounds = array<i64: 16, 1>}, {transform_indices = @transform_4, window_bounds = array<i64: 1, 1, 16, 1>}, {transform_indices = @transform_5, window_bounds = array<i64: 1, 1, 16, 1>}]} {
    %c0_i32 = arith.constant 0 : i32
    %0 = arith.cmpi eq, %arg2, %c0_i32 : i32
    %1 = arith.extui %0 : i1 to i32
    %c0_i32_0 = arith.constant 0 : i32
    %2 = arith.cmpi ne, %1, %c0_i32_0 : i32
    scf.if %2 {
      %cst_29 = arith.constant 0.000000e+00 : f32
      %31 = vector.broadcast %cst_29 : f32 to vector<1x1x16x1xf32>
      %c0_30 = arith.constant 0 : index
      %c0_31 = arith.constant 0 : index
      %c0_32 = arith.constant 0 : index
      %c0_33 = arith.constant 0 : index
      %32 = vector.load %arg7[%c0_30, %c0_31, %c0_32, %c0_33] : memref<1x1x16x1xf32, #tpu.memory_space<vmem>>, vector<1x1x16x1xf32>
      tpu.vector_store %arg7[%c0_30, %c0_31, %c0_32, %c0_33], %31 {strides = array<i32>} : memref<1x1x16x1xf32, #tpu.memory_space<vmem>>, vector<1x1x16x1xf32>,
      %cst_34 = arith.constant 0.000000e+00 : f32
      %33 = vector.broadcast %cst_34 : f32 to vector<1x1x16x1xf32>
      %c0_35 = arith.constant 0 : index
      %c0_36 = arith.constant 0 : index
      %c0_37 = arith.constant 0 : index
      %c0_38 = arith.constant 0 : index
      %34 = vector.load %arg8[%c0_35, %c0_36, %c0_37, %c0_38] : memref<1x1x16x1xf32, #tpu.memory_space<vmem>>, vector<1x1x16x1xf32>
      tpu.vector_store %arg8[%c0_35, %c0_36, %c0_37, %c0_38], %33 {strides = array<i32>} : memref<1x1x16x1xf32, #tpu.memory_space<vmem>>, vector<1x1x16x1xf32>,
    } else {
    }
    %c0 = arith.constant 0 : index
    %c0_1 = arith.constant 0 : index
    %c0_2 = arith.constant 0 : index
    %3 = vector.load %arg3[%c0, %c0_1, %c0_2] : memref<1x4x256xf32, #tpu.memory_space<vmem>>, vector<1x4x256xf32>
    %4 = vector.shape_cast %3 : vector<1x4x256xf32> to vector<4x256xf32>
    %c0_3 = arith.constant 0 : index
    %c0_4 = arith.constant 0 : index
    %5 = vector.load %arg4[%c0_3, %c0_4] : memref<16x4xf32, #tpu.memory_space<vmem>>, vector<16x4xf32>
    %cst = arith.constant dense<0.000000e+00> : vector<16x256xf32>
    %6 = tpu.matmul %5, %4, %cst {dimension_numbers = #tpu.dot_dimension_numbers<[1], [0], [0], [1], [0, 0, 1, 1], [], []>, precision = #tpu.contract_precision<fp32>} : vector<16x4xf32>, vector<4x256xf32>, vector<16x256xf32> -> vector<16x256xf32>
    %c0_5 = arith.constant 0 : index
    %c0_6 = arith.constant 0 : index
    %7 = vector.load %arg5[%c0_5, %c0_6] : memref<16x1xf32, #tpu.memory_space<vmem>>, vector<16x1xf32>
    %8 = vector.broadcast %7 : vector<16x1xf32> to vector<16x256xf32>
    %9 = arith.mulf %6, %8 : vector<16x256xf32>
    %c0_7 = arith.constant 0 : index
    %c0_8 = arith.constant 0 : index
    %10 = vector.load %arg6[%c0_7, %c0_8] : memref<16x1xf32, #tpu.memory_space<vmem>>, vector<16x1xf32>
    %11 = vector.broadcast %10 : vector<16x1xf32> to vector<16x256xf32>
    %12 = arith.addf %9, %11 : vector<16x256xf32>
    %cst_9 = arith.constant 0.000000e+00 : f32
    %13 = vector.broadcast %cst_9 : f32 to vector<16x256xf32>
    %14 = arith.cmpf oge, %12, %13 : vector<16x256xf32>
    %cst_10 = arith.constant 0.00999999977 : f32
    %15 = vector.broadcast %cst_10 : f32 to vector<16x256xf32>
    %16 = arith.mulf %15, %12 : vector<16x256xf32>
    %17 = arith.select %14, %12, %16 : vector<16x256xi1>, vector<16x256xf32>
    %c0_11 = arith.constant 0 : index
    %c0_12 = arith.constant 0 : index
    %c0_13 = arith.constant 0 : index
    %c0_14 = arith.constant 0 : index
    %18 = vector.load %arg7[%c0_11, %c0_12, %c0_13, %c0_14] : memref<1x1x16x1xf32, #tpu.memory_space<vmem>>, vector<1x1x16x1xf32>
    %cst_15 = arith.constant dense<0.000000e+00> : vector<16xf32>
    %19 = vector.multi_reduction <add>, %17, %cst_15 [1] : vector<16x256xf32> to vector<16xf32>
    %20 = vector.shape_cast %19 : vector<16xf32> to vector<16x1xf32>
    %21 = vector.shape_cast %20 : vector<16x1xf32> to vector<1x1x16x1xf32>
    %22 = arith.addf %18, %21 : vector<1x1x16x1xf32>
    %c0_16 = arith.constant 0 : index
    %c0_17 = arith.constant 0 : index
    %c0_18 = arith.constant 0 : index
    %c0_19 = arith.constant 0 : index
    %23 = vector.load %arg7[%c0_16, %c0_17, %c0_18, %c0_19] : memref<1x1x16x1xf32, #tpu.memory_space<vmem>>, vector<1x1x16x1xf32>
    tpu.vector_store %arg7[%c0_16, %c0_17, %c0_18, %c0_19], %22 {strides = array<i32>} : memref<1x1x16x1xf32, #tpu.memory_space<vmem>>, vector<1x1x16x1xf32>,
    %c0_20 = arith.constant 0 : index
    %c0_21 = arith.constant 0 : index
    %c0_22 = arith.constant 0 : index
    %c0_23 = arith.constant 0 : index
    %24 = vector.load %arg8[%c0_20, %c0_21, %c0_22, %c0_23] : memref<1x1x16x1xf32, #tpu.memory_space<vmem>>, vector<1x1x16x1xf32>
    %25 = arith.mulf %17, %17 : vector<16x256xf32>
    %cst_24 = arith.constant dense<0.000000e+00> : vector<16xf32>
    %26 = vector.multi_reduction <add>, %25, %cst_24 [1] : vector<16x256xf32> to vector<16xf32>
    %27 = vector.shape_cast %26 : vector<16xf32> to vector<16x1xf32>
    %28 = vector.shape_cast %27 : vector<16x1xf32> to vector<1x1x16x1xf32>
    %29 = arith.addf %24, %28 : vector<1x1x16x1xf32>
    %c0_25 = arith.constant 0 : index
    %c0_26 = arith.constant 0 : index
    %c0_27 = arith.constant 0 : index
    %c0_28 = arith.constant 0 : index
    %30 = vector.load %arg8[%c0_25, %c0_26, %c0_27, %c0_28] : memref<1x1x16x1xf32, #tpu.memory_space<vmem>>, vector<1x1x16x1xf32>
    tpu.vector_store %arg8[%c0_25, %c0_26, %c0_27, %c0_28], %29 {strides = array<i32>} : memref<1x1x16x1xf32, #tpu.memory_space<vmem>>, vector<1x1x16x1xf32>,
    return
  }
  func.func @transform_0(%arg0: i32, %arg1: i32, %arg2: i32) -> (i32, i32, i32) {
    %c1_i32 = arith.constant 1 : i32
    %0 = arith.muli %arg1, %c1_i32 : i32
    %1 = arith.addi %0, %arg2 : i32
    %c0_i32 = arith.constant 0 : i32
    %c0_i32_0 = arith.constant 0 : i32
    return %arg0, %c0_i32, %1 : i32, i32, i32
  }
  func.func @transform_1(%arg0: i32, %arg1: i32, %arg2: i32) -> (i32, i32) {
    %c0_i32 = arith.constant 0 : i32
    %c0_i32_0 = arith.constant 0 : i32
    %c0_i32_1 = arith.constant 0 : i32
    return %c0_i32, %c0_i32_0 : i32, i32
  }
  func.func @transform_2(%arg0: i32, %arg1: i32, %arg2: i32) -> (i32, i32) {
    %c0_i32 = arith.constant 0 : i32
    %c0_i32_0 = arith.constant 0 : i32
    %c0_i32_1 = arith.constant 0 : i32
    return %c0_i32, %c0_i32_0 : i32, i32
  }
  func.func @transform_3(%arg0: i32, %arg1: i32, %arg2: i32) -> (i32, i32) {
    %c0_i32 = arith.constant 0 : i32
    %c0_i32_0 = arith.constant 0 : i32
    %c0_i32_1 = arith.constant 0 : i32
    return %c0_i32, %c0_i32_0 : i32, i32
  }
  func.func @transform_4(%arg0: i32, %arg1: i32, %arg2: i32) -> (i32, i32, i32, i32) {
    %c0_i32 = arith.constant 0 : i32
    %c0_i32_0 = arith.constant 0 : i32
    %c0_i32_1 = arith.constant 0 : i32
    return %arg0, %arg1, %c0_i32, %c0_i32_0 : i32, i32, i32, i32
  }
  func.func @transform_5(%arg0: i32, %arg1: i32, %arg2: i32) -> (i32, i32, i32, i32) {
    %c0_i32 = arith.constant 0 : i32
    %c0_i32_0 = arith.constant 0 : i32
    %c0_i32_1 = arith.constant 0 : i32
    return %arg0, %arg1, %c0_i32, %c0_i32_0 : i32, i32, i32, i32
  }
}

module attributes {stable_mosaic.version = 11 : i64} {
  func.func @_apply_kernel(%arg0: i32, %arg1: i32, %arg2: memref<1x4x256xf32, #tpu.memory_space<vmem>>, %arg3: memref<16x4xf32, #tpu.memory_space<vmem>>, %arg4: memref<16x1xf32, #tpu.memory_space<vmem>>, %arg5: memref<16x1xf32, #tpu.memory_space<vmem>>, %arg6: memref<1x16x1xf32, #tpu.memory_space<vmem>>, %arg7: memref<16x1xf32, #tpu.memory_space<vmem>>, %arg8: memref<1x16x256xf32, #tpu.memory_space<vmem>>) attributes {dimension_semantics = [#tpu.dimension_semantics<parallel>, #tpu.dimension_semantics<parallel>], iteration_bounds = array<i64: 2, 1>, scalar_prefetch = 0 : i64, scratch_operands = 0 : i64, tpu.core_type = #tpu.core_type<tc>, window_params = [{transform_indices = @transform_0, window_bounds = array<i64: 1, 4, 256>}, {pipeline_mode = #tpu.pipeline_mode<synchronous>, transform_indices = @transform_1, window_bounds = array<i64: 16, 4>}, {pipeline_mode = #tpu.pipeline_mode<synchronous>, transform_indices = @transform_2, window_bounds = array<i64: 16, 1>}, {pipeline_mode = #tpu.pipeline_mode<synchronous>, transform_indices = @transform_3, window_bounds = array<i64: 16, 1>}, {transform_indices = @transform_4, window_bounds = array<i64: 1, 16, 1>}, {pipeline_mode = #tpu.pipeline_mode<synchronous>, transform_indices = @transform_5, window_bounds = array<i64: 16, 1>}, {transform_indices = @transform_6, window_bounds = array<i64: 1, 16, 256>}]} {
    %c0 = arith.constant 0 : index
    %c0_0 = arith.constant 0 : index
    %c0_1 = arith.constant 0 : index
    %0 = vector.load %arg2[%c0, %c0_0, %c0_1] : memref<1x4x256xf32, #tpu.memory_space<vmem>>, vector<1x4x256xf32>
    %1 = vector.shape_cast %0 : vector<1x4x256xf32> to vector<4x256xf32>
    %c0_2 = arith.constant 0 : index
    %c0_3 = arith.constant 0 : index
    %2 = vector.load %arg3[%c0_2, %c0_3] : memref<16x4xf32, #tpu.memory_space<vmem>>, vector<16x4xf32>
    %cst = arith.constant dense<0.000000e+00> : vector<16x256xf32>
    %3 = tpu.matmul %2, %1, %cst {dimension_numbers = #tpu.dot_dimension_numbers<[1], [0], [0], [1], [0, 0, 1, 1], [], []>, precision = #tpu.contract_precision<fp32>} : vector<16x4xf32>, vector<4x256xf32>, vector<16x256xf32> -> vector<16x256xf32>
    %c0_4 = arith.constant 0 : index
    %c0_5 = arith.constant 0 : index
    %4 = vector.load %arg4[%c0_4, %c0_5] : memref<16x1xf32, #tpu.memory_space<vmem>>, vector<16x1xf32>
    %5 = vector.broadcast %4 : vector<16x1xf32> to vector<16x256xf32>
    %6 = arith.mulf %3, %5 : vector<16x256xf32>
    %c0_6 = arith.constant 0 : index
    %c0_7 = arith.constant 0 : index
    %7 = vector.load %arg5[%c0_6, %c0_7] : memref<16x1xf32, #tpu.memory_space<vmem>>, vector<16x1xf32>
    %8 = vector.broadcast %7 : vector<16x1xf32> to vector<16x256xf32>
    %9 = arith.addf %6, %8 : vector<16x256xf32>
    %cst_8 = arith.constant 0.000000e+00 : f32
    %10 = vector.broadcast %cst_8 : f32 to vector<16x256xf32>
    %11 = arith.cmpf oge, %9, %10 : vector<16x256xf32>
    %cst_9 = arith.constant 0.00999999977 : f32
    %12 = vector.broadcast %cst_9 : f32 to vector<16x256xf32>
    %13 = arith.mulf %12, %9 : vector<16x256xf32>
    %14 = arith.select %11, %9, %13 : vector<16x256xi1>, vector<16x256xf32>
    %c0_10 = arith.constant 0 : index
    %c0_11 = arith.constant 0 : index
    %c0_12 = arith.constant 0 : index
    %15 = vector.load %arg6[%c0_10, %c0_11, %c0_12] : memref<1x16x1xf32, #tpu.memory_space<vmem>>, vector<1x16x1xf32>
    %16 = vector.shape_cast %15 : vector<1x16x1xf32> to vector<16x1xf32>
    %17 = vector.broadcast %16 : vector<16x1xf32> to vector<16x256xf32>
    %18 = arith.mulf %14, %17 : vector<16x256xf32>
    %c0_13 = arith.constant 0 : index
    %c0_14 = arith.constant 0 : index
    %19 = vector.load %arg7[%c0_13, %c0_14] : memref<16x1xf32, #tpu.memory_space<vmem>>, vector<16x1xf32>
    %20 = vector.broadcast %19 : vector<16x1xf32> to vector<16x256xf32>
    %21 = arith.addf %18, %20 : vector<16x256xf32>
    %cst_15 = arith.constant 0.000000e+00 : f32
    %22 = vector.broadcast %cst_15 : f32 to vector<16x256xf32>
    %23 = arith.cmpf oge, %21, %22 : vector<16x256xf32>
    %cst_16 = arith.constant 0.00999999977 : f32
    %24 = vector.broadcast %cst_16 : f32 to vector<16x256xf32>
    %25 = arith.mulf %24, %21 : vector<16x256xf32>
    %26 = arith.select %23, %21, %25 : vector<16x256xi1>, vector<16x256xf32>
    %27 = vector.shape_cast %26 : vector<16x256xf32> to vector<1x16x256xf32>
    %c0_17 = arith.constant 0 : index
    %c0_18 = arith.constant 0 : index
    %c0_19 = arith.constant 0 : index
    %28 = vector.load %arg8[%c0_17, %c0_18, %c0_19] : memref<1x16x256xf32, #tpu.memory_space<vmem>>, vector<1x16x256xf32>
    tpu.vector_store %arg8[%c0_17, %c0_18, %c0_19], %27 {strides = array<i32>} : memref<1x16x256xf32, #tpu.memory_space<vmem>>, vector<1x16x256xf32>,
    return
  }
  func.func @transform_0(%arg0: i32, %arg1: i32) -> (i32, i32, i32) {
    %c0_i32 = arith.constant 0 : i32
    %c0_i32_0 = arith.constant 0 : i32
    return %arg0, %c0_i32, %arg1 : i32, i32, i32
  }
  func.func @transform_1(%arg0: i32, %arg1: i32) -> (i32, i32) {
    %c0_i32 = arith.constant 0 : i32
    %c0_i32_0 = arith.constant 0 : i32
    %c0_i32_1 = arith.constant 0 : i32
    return %c0_i32, %c0_i32_0 : i32, i32
  }
  func.func @transform_2(%arg0: i32, %arg1: i32) -> (i32, i32) {
    %c0_i32 = arith.constant 0 : i32
    %c0_i32_0 = arith.constant 0 : i32
    %c0_i32_1 = arith.constant 0 : i32
    return %c0_i32, %c0_i32_0 : i32, i32
  }
  func.func @transform_3(%arg0: i32, %arg1: i32) -> (i32, i32) {
    %c0_i32 = arith.constant 0 : i32
    %c0_i32_0 = arith.constant 0 : i32
    %c0_i32_1 = arith.constant 0 : i32
    return %c0_i32, %c0_i32_0 : i32, i32
  }
  func.func @transform_4(%arg0: i32, %arg1: i32) -> (i32, i32, i32) {
    %c0_i32 = arith.constant 0 : i32
    %c0_i32_0 = arith.constant 0 : i32
    %c0_i32_1 = arith.constant 0 : i32
    return %arg0, %c0_i32, %c0_i32_0 : i32, i32, i32
  }
  func.func @transform_5(%arg0: i32, %arg1: i32) -> (i32, i32) {
    %c0_i32 = arith.constant 0 : i32
    %c0_i32_0 = arith.constant 0 : i32
    %c0_i32_1 = arith.constant 0 : i32
    return %c0_i32, %c0_i32_0 : i32, i32
  }
  func.func @transform_6(%arg0: i32, %arg1: i32) -> (i32, i32, i32) {
    %c0_i32 = arith.constant 0 : i32
    %c0_i32_0 = arith.constant 0 : i32
    return %arg0, %c0_i32, %arg1 : i32, i32, i32
  }
}

</mosaic_0001>

<llo_original>
// kernel: conv2d_channel_forward.3
$region0: #{conv2d_channel_forward.3}
  #allocation0 [shape = 'u32[]', space=smem, size = 0x4, offset = 0x4, fixed_abs, tag = 'smem constant byte address 0x4 - core index']
  #allocation1 [shape = 'u32[72,128]{1,0:T(1,128)}', space=vmem, size = 0x9000, scoped, tag = 'internal scratch']
  %s0 = inlined_call_operand.vmem [shape: f32[2,4,256], index: 0, kind: input, shape index: {}]
  %s1 = inlined_call_operand.vmem [shape: f32[2,1,4,4], index: 1, kind: output, shape index: {0}]
  %s2 = inlined_call_operand.vmem [shape: f32[2,1,4,1], index: 2, kind: output, shape index: {1}]
  %3 = xla_tuple %s1, %s2
  %s4 = sld [smem:[#allocation0]]
  $region49: #{conv2d_channel_forward.3} parent=0
    _
  %s6 = ssub.s32 1, %s4
  %s7 = scalar_select 0, %s6, %s4
  loop: start=0, step=1, limit=4
  $region2: #{conv2d_channel_forward.3} parent=0 // loop_pre_header
    _
  $region3: #{conv2d_channel_forward.3} parent=0 // loop_header
    %s9 = sphi 0, %s13
    %p10 = scmp.ge.s32.totalorder %s9, 4
    %s16 = sphi 0, %s35
    %s17 = sphi 0, %s31
    %s18 = sphi 0, %s27
    %s19 = sphi 0, %s16
    %s20 = sphi 0, %s17
    %s21 = sphi 0, %s18
    %s22 = sphi 0, %s19
    %s23 = sphi 0, %s20
    %s24 = sphi 0, %s21
    %s42 = sphi 0, %s44
    %s45 = sphi 0, %s42
    %s46 = sphi 0, %s45
    %s62 = sphi 0, %s46
    %s70 = sphi 0, %s72
    %s73 = sphi 0, %s70
    %s74 = sphi 0, %s73
    %s90 = sphi 0, %s74
    %s98 = sphi 0, %s100
    %s101 = sphi 0, %s98
    %s102 = sphi 0, %s101
    %s118 = sphi 0, %s102
  $region4: #{conv2d_channel_forward.3} parent=0 // loop_header_branch
    %12 = sbr.rel (%p10) target = $region8
  $region5: #{conv2d_channel_forward.3} parent=0 // loop_body
    %s14 = ssub.s32 %s9, 1
    %s15 = ssub.s32 %s9, 2
    %s25 = sadd.s32 1, %s18
    %p26 = scmp.ge.s32.totalorder %s25, 1
    %s27 = scalar_select %p26, 0, %s25
    %s28 = sadd.s32 1, %s17
    %s29 = scalar_select %p26, %s28, %s17
    %p30 = scmp.ge.s32.totalorder %s29, 1
    %s31 = scalar_select %p30, 0, %s29
    %s32 = sadd.s32 1, %s16
    %s33 = scalar_select %p30, %s32, %s16
    %p34 = scmp.ge.s32.totalorder %s33, 2
    %s35 = scalar_select %p34, 0, %s33
    %s36 = sadd.s32 %s17, %s18
    %s37 = sadd.s32 %s31, %s27
    %s38 = ssub.s32 %s16, %s35
    %s39 = ssub.s32 %s36, %s37
    %s40 = sor.u32 %s38, %s39
    %p41 = scmp.eq.s32.totalorder %s40, 0
    %s43 = sadd.s32 %s42, 1
    %s44 = scalar_select %p41, %s42, %s43
    %p47 = pneg %p41
    %p48 = scmp.eq.s32.totalorder %s9, 1
    %p49 = por %p47, %p48
    %p50 = scmp.ne.s32.totalorder %s42, %s45
    %p51 = scmp.eq.s32.totalorder %s9, 0
    %p52 = por %p50, %p51
    %p53 = scmp.ne.s32.totalorder %s42, %s45
    %p54 = scmp.eq.s32.totalorder %s14, 1
    %p55 = por %p53, %p54
    %p56 = scmp.ne.s32.totalorder %s45, %s46
    %p57 = scmp.eq.s32.totalorder %s14, 0
    %p58 = por %p56, %p57
    %p59 = scmp.ne.s32.totalorder %s45, %s46
    %p60 = scmp.eq.s32.totalorder %s15, 1
    %p61 = por %p59, %p60
    %p63 = scmp.ne.s32.totalorder %s46, %s62
    %p64 = scmp.eq.s32.totalorder %s15, 0
    %p65 = por %p63, %p64
    %s66 = ssub.s32 %s16, %s35
    %s67 = ssub.s32 %s17, %s31
    %s68 = sor.u32 %s66, %s67
    %p69 = scmp.eq.s32.totalorder %s68, 0
    %s71 = sadd.s32 %s70, 1
    %s72 = scalar_select %p69, %s70, %s71
    %p75 = pneg %p69
    %p76 = scmp.eq.s32.totalorder %s9, 1
    %p77 = por %p75, %p76
    %p78 = scmp.ne.s32.totalorder %s70, %s73
    %p79 = scmp.eq.s32.totalorder %s9, 0
    %p80 = por %p78, %p79
    %p81 = scmp.ne.s32.totalorder %s70, %s73
    %p82 = scmp.eq.s32.totalorder %s14, 1
    %p83 = por %p81, %p82
    %p84 = scmp.ne.s32.totalorder %s73, %s74
    %p85 = scmp.eq.s32.totalorder %s14, 0
    %p86 = por %p84, %p85
    %p87 = scmp.ne.s32.totalorder %s73, %s74
    %p88 = scmp.eq.s32.totalorder %s15, 1
    %p89 = por %p87, %p88
    %p91 = scmp.ne.s32.totalorder %s74, %s90
    %p92 = scmp.eq.s32.totalorder %s15, 0
    %p93 = por %p91, %p92
    %s94 = ssub.s32 %s16, %s35
    %s95 = ssub.s32 %s17, %s31
    %s96 = sor.u32 %s94, %s95
    %p97 = scmp.eq.s32.totalorder %s96, 0
    %s99 = sadd.s32 %s98, 1
    %s100 = scalar_select %p97, %s98, %s99
    %p103 = pneg %p97
    %p104 = scmp.eq.s32.totalorder %s9, 1
    %p105 = por %p103, %p104
    %p106 = scmp.ne.s32.totalorder %s98, %s101
    %p107 = scmp.eq.s32.totalorder %s9, 0
    %p108 = por %p106, %p107
    %p109 = scmp.ne.s32.totalorder %s98, %s101
    %p110 = scmp.eq.s32.totalorder %s14, 1
    %p111 = por %p109, %p110
    %p112 = scmp.ne.s32.totalorder %s101, %s102
    %p113 = scmp.eq.s32.totalorder %s14, 0
    %p114 = por %p112, %p113
    %p115 = scmp.ne.s32.totalorder %s101, %s102
    %p116 = scmp.eq.s32.totalorder %s15, 1
    %p117 = por %p115, %p116
    %p119 = scmp.ne.s32.totalorder %s102, %s118
    %p120 = scmp.eq.s32.totalorder %s15, 0
    %p121 = por %p119, %p120
    %p122 = scmp.le.s32.totalorder 1, %s9
    %p123 = scmp.lt.s32.totalorder %s9, 3
    %p124 = pnand %p122, %p123
    %p125 = pneg %p124
    // Predicated region
    $region9: #{conv2d_channel_forward.3} parent=5 // pred_check
      _
    $region10: #{conv2d_channel_forward.3} parent=5 // pred_check_branch
      %127 = sbr.rel (%p124) target = $region12
    $region11: #{conv2d_channel_forward.3} parent=5 // pred_region
      %s128 = ssub.s32 %s9, 1
    $region12: #{conv2d_channel_forward.3} parent=5 // pred_fallthru
      _
    %p129 = scmp.lt.s32.totalorder %s9, 2
    // Predicated region
    $region13: #{conv2d_channel_forward.3} parent=5 // pred_check
      %p130 = pneg %p129
    $region14: #{conv2d_channel_forward.3} parent=5 // pred_check_branch
      %132 = sbr.rel (%p130) target = $region16
    $region15: #{conv2d_channel_forward.3} parent=5 // pred_region
      // Predicated region
      $region17: #{conv2d_channel_forward.3} parent=15 // pred_check
        %p133 = pneg %p52
      $region18: #{conv2d_channel_forward.3} parent=15 // pred_check_branch
        %135 = sbr.rel (%p133) target = $region20
      $region19: #{conv2d_channel_forward.3} parent=15 // pred_region
        %s136 = sadd.s32 %s17, %s18
        %s137 = smul.u32 2, %s136
        %p138 = scmp.lt.s32.totalorder %s16, 1
        %s139 = scalar_select %p138, %s16, 1
        %p140 = scmp.lt.s32.totalorder %s137, 1
        %s141 = scalar_select %p140, %s137, 1
        %s142 = smul.addr %s139, 2
        %s143 = sadd.s32 %s141, %s142
        %s144 = smul.addr %s143, 4
        %s145 = scalar_lea.vmem %s0, %s144
        %s146 = sadd.s32 %s17, %s18
        %s147 = smul.u32 2, %s146
      $region20: #{conv2d_channel_forward.3} parent=15 // pred_fallthru
        _
    $region16: #{conv2d_channel_forward.3} parent=5 // pred_fallthru
      _
    %p148 = scmp.le.s32.totalorder 1, %s9
    %p149 = scmp.lt.s32.totalorder %s9, 3
    %p150 = pnand %p148, %p149
    %p151 = pneg %p150
    // Predicated region
    $region21: #{conv2d_channel_forward.3} parent=5 // pred_check
      _
    $region22: #{conv2d_channel_forward.3} parent=5 // pred_check_branch
      %153 = sbr.rel (%p150) target = $region24
    $region23: #{conv2d_channel_forward.3} parent=5 // pred_region
      %s154 = ssub.s32 %s9, 1
      %s155 = sadd.s32 %s20, %s21
      %s156 = smul.u32 2, %s155
      %p157 = scmp.lt.s32.totalorder %s19, 1
      %s158 = scalar_select %p157, %s19, 1
      %p159 = scmp.lt.s32.totalorder %s156, 1
      %s160 = scalar_select %p159, %s156, 1
      %s161 = smul.addr %s158, 2
      %s162 = sadd.s32 %s160, %s161
      %s163 = smul.addr %s162, 4
      %s164 = scalar_lea.vmem %s0, %s163
      %p165 = pneg %p58
      %p166 = pneg %p55
      %p167 = pneg %p86
      %p168 = pneg %p83
      %p169 = scmp.lt.s32.totalorder %s19, 1
      %s170 = scalar_select %p169, %s19, 1
      %p171 = scmp.lt.s32.totalorder %s20, 0
      %s172 = scalar_select %p171, %s20, 0
      %s173 = sadd.s32 %s172, %s170
      %s174 = smul.addr %s173, 4
      %s175 = scalar_lea.vmem %s1, %s174
      %p176 = pneg %p114
      %p177 = pneg %p111
      %p178 = scmp.lt.s32.totalorder %s19, 1
      %s179 = scalar_select %p178, %s19, 1
      %p180 = scmp.lt.s32.totalorder %s20, 0
      %s181 = scalar_select %p180, %s20, 0
      %s182 = sadd.s32 %s181, %s179
      %s183 = smul.addr %s182, 4
      %s184 = scalar_lea.vmem %s2, %s183
      %s185 = sadd.s32 %s20, %s21
      %s186 = smul.u32 2, %s185
      %p187 = scmp.lt.s32.totalorder %s19, 1
      %s188 = scalar_select %p187, %s19, 1
      %p189 = scmp.lt.s32.totalorder %s186, 1
      %s190 = scalar_select %p189, %s186, 1
      %s191 = smul.addr %s188, 2
      %s192 = sadd.s32 %s190, %s191
      %s193 = smul.addr %s192, 4
      %s194 = scalar_lea.vmem %s0, %s193
      %s195 = sadd.s32 %s20, %s21
      %s196 = smul.u32 2, %s195
      %p197 = scmp.lt.s32.totalorder %s19, 1
      %s198 = scalar_select %p197, %s19, 1
      %p199 = scmp.lt.s32.totalorder %s20, 0
      %s200 = scalar_select %p199, %s20, 0
      %s201 = sadd.s32 %s200, %s198
      %s202 = smul.addr %s201, 4
      %s203 = scalar_lea.vmem %s1, %s202
      %p204 = scmp.lt.s32.totalorder %s19, 1
      %s205 = scalar_select %p204, %s19, 1
      %p206 = scmp.lt.s32.totalorder %s20, 0
      %s207 = scalar_select %p206, %s20, 0
      %s208 = sadd.s32 %s207, %s205
      %s209 = smul.addr %s208, 4
      %s210 = scalar_lea.vmem %s2, %s209
      %p211 = scmp.eq.s32.totalorder %s21, 0
      // Predicated region
      $region25: #{conv2d_channel_forward.3} parent=23 // pred_check
        %p212 = pneg %p211
      $region26: #{conv2d_channel_forward.3} parent=23 // pred_check_branch
        %214 = sbr.rel (%p212) target = $region28
      $region27: #{conv2d_channel_forward.3} parent=23 // pred_region
        %vm215 = vcmask 27648
        %216 = vst.msk [vmem:[%s203] sm:$0xf] %vm215, 0.0
        %vm217 = vcmask 3072
        %218 = vst.msk [vmem:[%s210] sm:$0xf] %vm217, 0.0
      $region28: #{conv2d_channel_forward.3} parent=23 // pred_fallthru
        _
      %v219 = vld [vmem:[%s194] sm:$0xff]
      %221 = vst [vmem:[#allocation1] ss:$2 sm:$0xff] %v219
      %v222 = vld.sshfl [vmem:[#allocation1] sm:$0xff pattern:$0x75316420]
      %v223 = vld.sshfl [vmem:[#allocation1 + $0x8] sm:$0xff pattern:$0x75316420]
      %226 = vst [vmem:[#allocation1] ss:$2 sm:$0xff] %v219
      %v227 = vld.sshfl [vmem:[#allocation1] sm:$0xff pattern:$0x75316420]
      %v228 = vld.sshfl [vmem:[#allocation1 + $0x8] sm:$0xff pattern:$0x75316420]
      %231 = vmatpush.xpose.msra.mxu0 0.0
      %232 = vmatpush.xpose.msra.mxu0 0.0
      %233 = vmatpush.xpose.msra.mxu0 0.0
      %234 = vmatpush.xpose.msra.mxu0 0.0
      %235 = vmatpush.xpose.msra.mxu0 0.0
      %236 = vmatpush.xpose.msra.mxu0 0.0
      %237 = vmatpush.xpose.msra.mxu0 0.0
      %238 = vmatpush.xpose.msra.mxu0 0.0
      %239 = vmatpush.xpose.msra.mxu0 0.0
      %240 = vmatpush.xpose.msra.mxu0 0.0
      %241 = vmatpush.xpose.msra.mxu0 0.0
      %242 = vmatpush.xpose.msra.mxu0 0.0
      %243 = vmatpush.xpose.msra.mxu0 0.0
      %244 = vmatpush.xpose.msra.mxu0 0.0
      %245 = vmatpush.xpose.msra.mxu0 0.0
      %v246 = vand.u32 %v227, 4294901760
      %247 = vmatpush.xpose.msra.mxu0 %v246
      %v248 = vand.u32 %v222, 4294901760
      %v249 = vsub.f32 %v222, %v248
      %v250 = vand.u32 %v249, 4294901760
      %v251 = vsub.f32 %v249, %v250
      %v252 = vand.u32 %v251, 4294901760
      %253 = vmatmul.f32.gmra.mxu0 %v252
      %v254 = vpop.f32.mrf.mxu0
      %v255 = vadd.f32 0.0, %v254
      %256 = vdwg.mxu0
      %257 = vmatpush.xpose.msra.mxu0 0.0
      %258 = vmatpush.xpose.msra.mxu0 0.0
      %259 = vmatpush.xpose.msra.mxu0 0.0
      %260 = vmatpush.xpose.msra.mxu0 0.0
      %261 = vmatpush.xpose.msra.mxu0 0.0
      %262 = vmatpush.xpose.msra.mxu0 0.0
      %263 = vmatpush.xpose.msra.mxu0 0.0
      %264 = vmatpush.xpose.msra.mxu0 0.0
      %265 = vmatpush.xpose.msra.mxu0 0.0
      %266 = vmatpush.xpose.msra.mxu0 0.0
      %267 = vmatpush.xpose.msra.mxu0 0.0
      %268 = vmatpush.xpose.msra.mxu0 0.0
      %269 = vmatpush.xpose.msra.mxu0 0.0
      %270 = vmatpush.xpose.msra.mxu0 0.0
      %271 = vmatpush.xpose.msra.mxu0 0.0
      %v272 = vand.u32 %v227, 4294901760
      %v273 = vsub.f32 %v227, %v272
      %v274 = vand.u32 %v273, 4294901760
      %v275 = vsub.f32 %v273, %v274
      %v276 = vand.u32 %v275, 4294901760
      %277 = vmatpush.xpose.msra.mxu0 %v276
      %v278 = vand.u32 %v222, 4294901760
      %279 = vmatmul.f32.gmra.mxu0 %v278
      %v280 = vpop.f32.mrf.mxu0
      %v281 = vadd.f32 %v255, %v280
      %282 = vdwg.mxu0
      %283 = vmatpush.xpose.msra.mxu0 0.0
      %284 = vmatpush.xpose.msra.mxu0 0.0
      %285 = vmatpush.xpose.msra.mxu0 0.0
      %286 = vmatpush.xpose.msra.mxu0 0.0
      %287 = vmatpush.xpose.msra.mxu0 0.0
      %288 = vmatpush.xpose.msra.mxu0 0.0
      %289 = vmatpush.xpose.msra.mxu0 0.0
      %290 = vmatpush.xpose.msra.mxu0 0.0
      %291 = vmatpush.xpose.msra.mxu0 0.0
      %292 = vmatpush.xpose.msra.mxu0 0.0
      %293 = vmatpush.xpose.msra.mxu0 0.0
      %294 = vmatpush.xpose.msra.mxu0 0.0
      %295 = vmatpush.xpose.msra.mxu0 0.0
      %296 = vmatpush.xpose.msra.mxu0 0.0
      %297 = vmatpush.xpose.msra.mxu0 0.0
      %v298 = vand.u32 %v227, 4294901760
      %v299 = vsub.f32 %v227, %v298
      %300 = vmatpush.xpose.msra.mxu0 %v299
      %v301 = vand.u32 %v222, 4294901760
      %v302 = vsub.f32 %v222, %v301
      %303 = vmatmul.f32.gmra.mxu0 %v302
      %v304 = vpop.f32.mrf.mxu0
      %v305 = vadd.f32 %v281, %v304
      %306 = vdwg.mxu0
      %307 = vmatpush.xpose.msra.mxu0 0.0
      %308 = vmatpush.xpose.msra.mxu0 0.0
      %309 = vmatpush.xpose.msra.mxu0 0.0
      %310 = vmatpush.xpose.msra.mxu0 0.0
      %311 = vmatpush.xpose.msra.mxu0 0.0
      %312 = vmatpush.xpose.msra.mxu0 0.0
      %313 = vmatpush.xpose.msra.mxu0 0.0
      %314 = vmatpush.xpose.msra.mxu0 0.0
      %315 = vmatpush.xpose.msra.mxu0 0.0
      %316 = vmatpush.xpose.msra.mxu0 0.0
      %317 = vmatpush.xpose.msra.mxu0 0.0
      %318 = vmatpush.xpose.msra.mxu0 0.0
      %319 = vmatpush.xpose.msra.mxu0 0.0
      %320 = vmatpush.xpose.msra.mxu0 0.0
      %321 = vmatpush.xpose.msra.mxu0 0.0
      %v322 = vand.u32 %v227, 4294901760
      %323 = vmatpush.xpose.msra.mxu0 %v322
      %v324 = vand.u32 %v222, 4294901760
      %v325 = vsub.f32 %v222, %v324
      %v326 = vand.u32 %v325, 4294901760
      %327 = vmatmul.f32.gmra.mxu0 %v326
      %v328 = vpop.f32.mrf.mxu0
      %v329 = vadd.f32 %v305, %v328
      %330 = vdwg.mxu0
      %331 = vmatpush.xpose.msra.mxu0 0.0
      %332 = vmatpush.xpose.msra.mxu0 0.0
      %333 = vmatpush.xpose.msra.mxu0 0.0
      %334 = vmatpush.xpose.msra.mxu0 0.0
      %335 = vmatpush.xpose.msra.mxu0 0.0
      %336 = vmatpush.xpose.msra.mxu0 0.0
      %337 = vmatpush.xpose.msra.mxu0 0.0
      %338 = vmatpush.xpose.msra.mxu0 0.0
      %339 = vmatpush.xpose.msra.mxu0 0.0
      %340 = vmatpush.xpose.msra.mxu0 0.0
      %341 = vmatpush.xpose.msra.mxu0 0.0
      %342 = vmatpush.xpose.msra.mxu0 0.0
      %343 = vmatpush.xpose.msra.mxu0 0.0
      %344 = vmatpush.xpose.msra.mxu0 0.0
      %345 = vmatpush.xpose.msra.mxu0 0.0
      %v346 = vand.u32 %v227, 4294901760
      %v347 = vsub.f32 %v227, %v346
      %v348 = vand.u32 %v347, 4294901760
      %349 = vmatpush.xpose.msra.mxu0 %v348
      %v350 = vand.u32 %v222, 4294901760
      %351 = vmatmul.f32.gmra.mxu0 %v350
      %v352 = vpop.f32.mrf.mxu0
      %v353 = vadd.f32 %v329, %v352
      %354 = vdwg.mxu0
      %355 = vmatpush.xpose.msra.mxu0 0.0
      %356 = vmatpush.xpose.msra.mxu0 0.0
      %357 = vmatpush.xpose.msra.mxu0 0.0
      %358 = vmatpush.xpose.msra.mxu0 0.0
      %359 = vmatpush.xpose.msra.mxu0 0.0
      %360 = vmatpush.xpose.msra.mxu0 0.0
      %361 = vmatpush.xpose.msra.mxu0 0.0
      %362 = vmatpush.xpose.msra.mxu0 0.0
      %363 = vmatpush.xpose.msra.mxu0 0.0
      %364 = vmatpush.xpose.msra.mxu0 0.0
      %365 = vmatpush.xpose.msra.mxu0 0.0
      %366 = vmatpush.xpose.msra.mxu0 0.0
      %367 = vmatpush.xpose.msra.mxu0 0.0
      %368 = vmatpush.xpose.msra.mxu0 0.0
      %369 = vmatpush.xpose.msra.mxu0 0.0
      %v370 = vand.u32 %v227, 4294901760
      %371 = vmatpush.xpose.msra.mxu0 %v370
      %v372 = vand.u32 %v222, 4294901760
      %373 = vmatmul.f32.gmra.mxu0 %v372
      %v374 = vpop.f32.mrf.mxu0
      %v375 = vadd.f32 %v353, %v374
      %376 = vdwg.mxu0
      %377 = vmatpush.xpose.msra.mxu0 0.0
      %378 = vmatpush.xpose.msra.mxu0 0.0
      %379 = vmatpush.xpose.msra.mxu0 0.0
      %380 = vmatpush.xpose.msra.mxu0 0.0
      %381 = vmatpush.xpose.msra.mxu0 0.0
      %382 = vmatpush.xpose.msra.mxu0 0.0
      %383 = vmatpush.xpose.msra.mxu0 0.0
      %384 = vmatpush.xpose.msra.mxu0 0.0
      %385 = vmatpush.xpose.msra.mxu0 0.0
      %386 = vmatpush.xpose.msra.mxu0 0.0
      %387 = vmatpush.xpose.msra.mxu0 0.0
      %388 = vmatpush.xpose.msra.mxu0 0.0
      %389 = vmatpush.xpose.msra.mxu0 0.0
      %390 = vmatpush.xpose.msra.mxu0 0.0
      %391 = vmatpush.xpose.msra.mxu0 0.0
      %v392 = vand.u32 %v228, 4294901760
      %393 = vmatpush.xpose.msra.mxu0 %v392
      %v394 = vand.u32 %v223, 4294901760
      %v395 = vsub.f32 %v223, %v394
      %v396 = vand.u32 %v395, 4294901760
      %v397 = vsub.f32 %v395, %v396
      %v398 = vand.u32 %v397, 4294901760
      %399 = vmatmul.f32.gmra.mxu0 %v398
      %v400 = vpop.f32.mrf.mxu0
      %v401 = vadd.f32 %v375, %v400
      %402 = vdwg.mxu0
      %403 = vmatpush.xpose.msra.mxu0 0.0
      %404 = vmatpush.xpose.msra.mxu0 0.0
      %405 = vmatpush.xpose.msra.mxu0 0.0
      %406 = vmatpush.xpose.msra.mxu0 0.0
      %407 = vmatpush.xpose.msra.mxu0 0.0
      %408 = vmatpush.xpose.msra.mxu0 0.0
      %409 = vmatpush.xpose.msra.mxu0 0.0
      %410 = vmatpush.xpose.msra.mxu0 0.0
      %411 = vmatpush.xpose.msra.mxu0 0.0
      %412 = vmatpush.xpose.msra.mxu0 0.0
      %413 = vmatpush.xpose.msra.mxu0 0.0
      %414 = vmatpush.xpose.msra.mxu0 0.0
      %415 = vmatpush.xpose.msra.mxu0 0.0
      %416 = vmatpush.xpose.msra.mxu0 0.0
      %417 = vmatpush.xpose.msra.mxu0 0.0
      %v418 = vand.u32 %v228, 4294901760
      %v419 = vsub.f32 %v228, %v418
      %v420 = vand.u32 %v419, 4294901760
      %v421 = vsub.f32 %v419, %v420
      %v422 = vand.u32 %v421, 4294901760
      %423 = vmatpush.xpose.msra.mxu0 %v422
      %v424 = vand.u32 %v223, 4294901760
      %425 = vmatmul.f32.gmra.mxu0 %v424
      %v426 = vpop.f32.mrf.mxu0
      %v427 = vadd.f32 %v401, %v426
      %428 = vdwg.mxu0
      %429 = vmatpush.xpose.msra.mxu0 0.0
      %430 = vmatpush.xpose.msra.mxu0 0.0
      %431 = vmatpush.xpose.msra.mxu0 0.0
      %432 = vmatpush.xpose.msra.mxu0 0.0
      %433 = vmatpush.xpose.msra.mxu0 0.0
      %434 = vmatpush.xpose.msra.mxu0 0.0
      %435 = vmatpush.xpose.msra.mxu0 0.0
      %436 = vmatpush.xpose.msra.mxu0 0.0
      %437 = vmatpush.xpose.msra.mxu0 0.0
      %438 = vmatpush.xpose.msra.mxu0 0.0
      %439 = vmatpush.xpose.msra.mxu0 0.0
      %440 = vmatpush.xpose.msra.mxu0 0.0
      %441 = vmatpush.xpose.msra.mxu0 0.0
      %442 = vmatpush.xpose.msra.mxu0 0.0
      %443 = vmatpush.xpose.msra.mxu0 0.0
      %v444 = vand.u32 %v228, 4294901760
      %v445 = vsub.f32 %v228, %v444
      %446 = vmatpush.xpose.msra.mxu0 %v445
      %v447 = vand.u32 %v223, 4294901760
      %v448 = vsub.f32 %v223, %v447
      %449 = vmatmul.f32.gmra.mxu0 %v448
      %v450 = vpop.f32.mrf.mxu0
      %v451 = vadd.f32 %v427, %v450
      %452 = vdwg.mxu0
      %453 = vmatpush.xpose.msra.mxu0 0.0
      %454 = vmatpush.xpose.msra.mxu0 0.0
      %455 = vmatpush.xpose.msra.mxu0 0.0
      %456 = vmatpush.xpose.msra.mxu0 0.0
      %457 = vmatpush.xpose.msra.mxu0 0.0
      %458 = vmatpush.xpose.msra.mxu0 0.0
      %459 = vmatpush.xpose.msra.mxu0 0.0
      %460 = vmatpush.xpose.msra.mxu0 0.0
      %461 = vmatpush.xpose.msra.mxu0 0.0
      %462 = vmatpush.xpose.msra.mxu0 0.0
      %463 = vmatpush.xpose.msra.mxu0 0.0
      %464 = vmatpush.xpose.msra.mxu0 0.0
      %465 = vmatpush.xpose.msra.mxu0 0.0
      %466 = vmatpush.xpose.msra.mxu0 0.0
      %467 = vmatpush.xpose.msra.mxu0 0.0
      %v468 = vand.u32 %v228, 4294901760
      %469 = vmatpush.xpose.msra.mxu0 %v468
      %v470 = vand.u32 %v223, 4294901760
      %v471 = vsub.f32 %v223, %v470
      %v472 = vand.u32 %v471, 4294901760
      %473 = vmatmul.f32.gmra.mxu0 %v472
      %v474 = vpop.f32.mrf.mxu0
      %v475 = vadd.f32 %v451, %v474
      %476 = vdwg.mxu0
      %477 = vmatpush.xpose.msra.mxu0 0.0
      %478 = vmatpush.xpose.msra.mxu0 0.0
      %479 = vmatpush.xpose.msra.mxu0 0.0
      %480 = vmatpush.xpose.msra.mxu0 0.0
      %481 = vmatpush.xpose.msra.mxu0 0.0
      %482 = vmatpush.xpose.msra.mxu0 0.0
      %483 = vmatpush.xpose.msra.mxu0 0.0
      %484 = vmatpush.xpose.msra.mxu0 0.0
      %485 = vmatpush.xpose.msra.mxu0 0.0
      %486 = vmatpush.xpose.msra.mxu0 0.0
      %487 = vmatpush.xpose.msra.mxu0 0.0
      %488 = vmatpush.xpose.msra.mxu0 0.0
      %489 = vmatpush.xpose.msra.mxu0 0.0
      %490 = vmatpush.xpose.msra.mxu0 0.0
      %491 = vmatpush.xpose.msra.mxu0 0.0
      %v492 = vand.u32 %v228, 4294901760
      %v493 = vsub.f32 %v228, %v492
      %v494 = vand.u32 %v493, 4294901760
      %495 = vmatpush.xpose.msra.mxu0 %v494
      %v496 = vand.u32 %v223, 4294901760
      %497 = vmatmul.f32.gmra.mxu0 %v496
      %v498 = vpop.f32.mrf.mxu0
      %v499 = vadd.f32 %v475, %v498
      %500 = vdwg.mxu0
      %501 = vmatpush.xpose.msra.mxu0 0.0
      %502 = vmatpush.xpose.msra.mxu0 0.0
      %503 = vmatpush.xpose.msra.mxu0 0.0
      %504 = vmatpush.xpose.msra.mxu0 0.0
      %505 = vmatpush.xpose.msra.mxu0 0.0
      %506 = vmatpush.xpose.msra.mxu0 0.0
      %507 = vmatpush.xpose.msra.mxu0 0.0
      %508 = vmatpush.xpose.msra.mxu0 0.0
      %509 = vmatpush.xpose.msra.mxu0 0.0
      %510 = vmatpush.xpose.msra.mxu0 0.0
      %511 = vmatpush.xpose.msra.mxu0 0.0
      %512 = vmatpush.xpose.msra.mxu0 0.0
      %513 = vmatpush.xpose.msra.mxu0 0.0
      %514 = vmatpush.xpose.msra.mxu0 0.0
      %515 = vmatpush.xpose.msra.mxu0 0.0
      %v516 = vand.u32 %v228, 4294901760
      %517 = vmatpush.xpose.msra.mxu0 %v516
      %v518 = vand.u32 %v223, 4294901760
      %519 = vmatmul.f32.gmra.mxu0 %v518
      %v520 = vpop.f32.mrf.mxu0
      %v521 = vadd.f32 %v499, %v520
      %522 = vdwg.mxu0
      %v523 = vld [vmem:[%s203] sm:$0xf]
      %v524 = vadd.f32 %v523, %v521
      %vm525 = vcmask 27648
      %526 = vst.msk [vmem:[%s203] sm:$0xf] %vm525, %v524
      %v527 = vld [vmem:[%s210] sm:$0xf]
      %528 = vst [vmem:[#allocation1] ss:$2 sm:$0xff] %v219
      %v529 = vld.sshfl [vmem:[#allocation1] sm:$0xff pattern:$0x75316420]
      %v530 = vld.sshfl [vmem:[#allocation1 + $0x8] sm:$0xff pattern:$0x75316420]
      %vm533 = vcmask 1043456
      %v534 = vsel %vm533, %v529, 0.0
      %v535 = vsel %vm533, %v530, 0.0
      %v536 = vadd.f32 %v534, %v535
      %537 = vadd.xlane.f32.xlu0 %v536
      %v538 = vpop.xlane.xlu0 %537
      %v539 = vadd.f32 %v527, %v538
      %vm540 = vcmask 3072
      %541 = vst.msk [vmem:[%s210] sm:$0xf] %vm540, %v539
      %p542 = scmp.lt.s32.totalorder %s19, 1
      %s543 = scalar_select %p542, %s19, 1
      %p544 = scmp.lt.s32.totalorder %s20, 0
      %s545 = scalar_select %p544, %s20, 0
      %s546 = sadd.s32 %s545, %s543
      %s547 = smul.addr %s546, 4
      %s548 = scalar_lea.vmem %s1, %s547
      %p549 = scmp.lt.s32.totalorder %s19, 1
      %s550 = scalar_select %p549, %s19, 1
      %p551 = scmp.lt.s32.totalorder %s20, 0
      %s552 = scalar_select %p551, %s20, 0
      %s553 = sadd.s32 %s552, %s550
      %s554 = smul.addr %s553, 4
      %s555 = scalar_lea.vmem %s2, %s554
      // Predicated region
      $region29: #{conv2d_channel_forward.3} parent=23 // pred_check
        %p556 = pneg %p83
      $region30: #{conv2d_channel_forward.3} parent=23 // pred_check_branch
        %558 = sbr.rel (%p556) target = $region32
      $region31: #{conv2d_channel_forward.3} parent=23 // pred_region
        _
      $region32: #{conv2d_channel_forward.3} parent=23 // pred_fallthru
        _
      // Predicated region
      $region33: #{conv2d_channel_forward.3} parent=23 // pred_check
        %p559 = pneg %p111
      $region34: #{conv2d_channel_forward.3} parent=23 // pred_check_branch
        %561 = sbr.rel (%p559) target = $region36
      $region35: #{conv2d_channel_forward.3} parent=23 // pred_region
        _
      $region36: #{conv2d_channel_forward.3} parent=23 // pred_fallthru
        _
    $region24: #{conv2d_channel_forward.3} parent=5 // pred_fallthru
      _
    %p562 = scmp.le.s32.totalorder 2, %s9
    // Predicated region
    $region37: #{conv2d_channel_forward.3} parent=5 // pred_check
      %p563 = pneg %p562
    $region38: #{conv2d_channel_forward.3} parent=5 // pred_check_branch
      %565 = sbr.rel (%p563) target = $region40
    $region39: #{conv2d_channel_forward.3} parent=5 // pred_region
      %s566 = ssub.s32 %s9, 2
      // Predicated region
      $region41: #{conv2d_channel_forward.3} parent=39 // pred_check
        %p567 = pneg %p89
      $region42: #{conv2d_channel_forward.3} parent=39 // pred_check_branch
        %569 = sbr.rel (%p567) target = $region44
      $region43: #{conv2d_channel_forward.3} parent=39 // pred_region
        %p570 = scmp.lt.s32.totalorder %s22, 1
        %s571 = scalar_select %p570, %s22, 1
        %p572 = scmp.lt.s32.totalorder %s23, 0
        %s573 = scalar_select %p572, %s23, 0
        %s574 = sadd.s32 %s573, %s571
        %s575 = smul.addr %s574, 4
        %s576 = scalar_lea.vmem %s1, %s575
      $region44: #{conv2d_channel_forward.3} parent=39 // pred_fallthru
        _
      // Predicated region
      $region45: #{conv2d_channel_forward.3} parent=39 // pred_check
        %p577 = pneg %p117
      $region46: #{conv2d_channel_forward.3} parent=39 // pred_check_branch
        %579 = sbr.rel (%p577) target = $region48
      $region47: #{conv2d_channel_forward.3} parent=39 // pred_region
        %p580 = scmp.lt.s32.totalorder %s22, 1
        %s581 = scalar_select %p580, %s22, 1
        %p582 = scmp.lt.s32.totalorder %s23, 0
        %s583 = scalar_select %p582, %s23, 0
        %s584 = sadd.s32 %s583, %s581
        %s585 = smul.addr %s584, 4
        %s586 = scalar_lea.vmem %s2, %s585
      $region48: #{conv2d_channel_forward.3} parent=39 // pred_fallthru
        _
    $region40: #{conv2d_channel_forward.3} parent=5 // pred_fallthru
      _
  $region6: #{conv2d_channel_forward.3} parent=0 // loop_footer
    %s13 = sadd.s32 1, %s9
  $region7: #{conv2d_channel_forward.3} parent=0 // loop_footer_branch
    %8 = sbr.rel target = $region3
  $region8: #{conv2d_channel_forward.3} parent=0 // loop_exit
    _

// kernel: conv2d_channel_forward.4
$region0: #{conv2d_channel_forward.4}
  #allocation0 [shape = 'u32[]', space=smem, size = 0x4, offset = 0x4, fixed_abs, tag = 'smem constant byte address 0x4 - core index']
  #allocation1 [shape = 'u32[72,128]{1,0:T(1,128)}', space=vmem, size = 0x9000, scoped, tag = 'internal scratch']
  %s0 = inlined_call_operand.vmem [shape: f32[2,4,256], index: 0, kind: input, shape index: {}]
  %s1 = inlined_call_operand.vmem [shape: f32[16,4], index: 1, kind: input, shape index: {}]
  %s2 = inlined_call_operand.vmem [shape: f32[16,1], index: 2, kind: input, shape index: {}]
  %s3 = inlined_call_operand.vmem [shape: f32[16,1], index: 3, kind: input, shape index: {}]
  %s4 = inlined_call_operand.vmem [shape: f32[2,1,16,1], index: 4, kind: output, shape index: {0}]
  %s5 = inlined_call_operand.vmem [shape: f32[2,1,16,1], index: 5, kind: output, shape index: {1}]
  %6 = xla_tuple %s4, %s5
  %s7 = sld [smem:[#allocation0]]
  $region61: #{conv2d_channel_forward.4} parent=0
    _
  %s9 = ssub.s32 1, %s7
  %s10 = scalar_select 0, %s9, %s7
  loop: start=0, step=1, limit=4
  $region2: #{conv2d_channel_forward.4} parent=0 // loop_pre_header
    _
  $region3: #{conv2d_channel_forward.4} parent=0 // loop_header
    %s12 = sphi 0, %s16
    %p13 = scmp.ge.s32.totalorder %s12, 4
    %s19 = sphi 0, %s38
    %s20 = sphi 0, %s34
    %s21 = sphi 0, %s30
    %s22 = sphi 0, %s19
    %s23 = sphi 0, %s20
    %s24 = sphi 0, %s21
    %s25 = sphi 0, %s22
    %s26 = sphi 0, %s23
    %s27 = sphi 0, %s24
    %s45 = sphi 0, %s47
    %s48 = sphi 0, %s45
    %s49 = sphi 0, %s48
    %s65 = sphi 0, %s49
    %s69 = sphi 0, %s69
    %s71 = sphi 0, %s69
    %s72 = sphi 0, %s71
    %s86 = sphi 0, %s72
    %s90 = sphi 0, %s90
    %s92 = sphi 0, %s90
    %s93 = sphi 0, %s92
    %s107 = sphi 0, %s93
    %s111 = sphi 0, %s111
    %s113 = sphi 0, %s111
    %s114 = sphi 0, %s113
    %s128 = sphi 0, %s114
    %s136 = sphi 0, %s138
    %s139 = sphi 0, %s136
    %s140 = sphi 0, %s139
    %s156 = sphi 0, %s140
    %s164 = sphi 0, %s166
    %s167 = sphi 0, %s164
    %s168 = sphi 0, %s167
    %s184 = sphi 0, %s168
  $region4: #{conv2d_channel_forward.4} parent=0 // loop_header_branch
    %15 = sbr.rel (%p13) target = $region8
  $region5: #{conv2d_channel_forward.4} parent=0 // loop_body
    %s17 = ssub.s32 %s12, 1
    %s18 = ssub.s32 %s12, 2
    %s28 = sadd.s32 1, %s21
    %p29 = scmp.ge.s32.totalorder %s28, 1
    %s30 = scalar_select %p29, 0, %s28
    %s31 = sadd.s32 1, %s20
    %s32 = scalar_select %p29, %s31, %s20
    %p33 = scmp.ge.s32.totalorder %s32, 1
    %s34 = scalar_select %p33, 0, %s32
    %s35 = sadd.s32 1, %s19
    %s36 = scalar_select %p33, %s35, %s19
    %p37 = scmp.ge.s32.totalorder %s36, 2
    %s38 = scalar_select %p37, 0, %s36
    %s39 = sadd.s32 %s20, %s21
    %s40 = sadd.s32 %s34, %s30
    %s41 = ssub.s32 %s19, %s38
    %s42 = ssub.s32 %s39, %s40
    %s43 = sor.u32 %s41, %s42
    %p44 = scmp.eq.s32.totalorder %s43, 0
    %s46 = sadd.s32 %s45, 1
    %s47 = scalar_select %p44, %s45, %s46
    %p50 = pneg %p44
    %p51 = scmp.eq.s32.totalorder %s12, 1
    %p52 = por %p50, %p51
    %p53 = scmp.ne.s32.totalorder %s45, %s48
    %p54 = scmp.eq.s32.totalorder %s12, 0
    %p55 = por %p53, %p54
    %p56 = scmp.ne.s32.totalorder %s45, %s48
    %p57 = scmp.eq.s32.totalorder %s17, 1
    %p58 = por %p56, %p57
    %p59 = scmp.ne.s32.totalorder %s48, %s49
    %p60 = scmp.eq.s32.totalorder %s17, 0
    %p61 = por %p59, %p60
    %p62 = scmp.ne.s32.totalorder %s48, %s49
    %p63 = scmp.eq.s32.totalorder %s18, 1
    %p64 = por %p62, %p63
    %p66 = scmp.ne.s32.totalorder %s49, %s65
    %p67 = scmp.eq.s32.totalorder %s18, 0
    %p68 = por %p66, %p67
    %s70 = sadd.s32 %s69, 1
    %p73 = scmp.eq.s32.totalorder %s12, 1
    %p74 = scmp.ne.s32.totalorder %s69, %s71
    %p75 = scmp.eq.s32.totalorder %s12, 0
    %p76 = por %p74, %p75
    %p77 = scmp.ne.s32.totalorder %s69, %s71
    %p78 = scmp.eq.s32.totalorder %s17, 1
    %p79 = por %p77, %p78
    %p80 = scmp.ne.s32.totalorder %s71, %s72
    %p81 = scmp.eq.s32.totalorder %s17, 0
    %p82 = por %p80, %p81
    %p83 = scmp.ne.s32.totalorder %s71, %s72
    %p84 = scmp.eq.s32.totalorder %s18, 1
    %p85 = por %p83, %p84
    %p87 = scmp.ne.s32.totalorder %s72, %s86
    %p88 = scmp.eq.s32.totalorder %s18, 0
    %p89 = por %p87, %p88
    %s91 = sadd.s32 %s90, 1
    %p94 = scmp.eq.s32.totalorder %s12, 1
    %p95 = scmp.ne.s32.totalorder %s90, %s92
    %p96 = scmp.eq.s32.totalorder %s12, 0
    %p97 = por %p95, %p96
    %p98 = scmp.ne.s32.totalorder %s90, %s92
    %p99 = scmp.eq.s32.totalorder %s17, 1
    %p100 = por %p98, %p99
    %p101 = scmp.ne.s32.totalorder %s92, %s93
    %p102 = scmp.eq.s32.totalorder %s17, 0
    %p103 = por %p101, %p102
    %p104 = scmp.ne.s32.totalorder %s92, %s93
    %p105 = scmp.eq.s32.totalorder %s18, 1
    %p106 = por %p104, %p105
    %p108 = scmp.ne.s32.totalorder %s93, %s107
    %p109 = scmp.eq.s32.totalorder %s18, 0
    %p110 = por %p108, %p109
    %s112 = sadd.s32 %s111, 1
    %p115 = scmp.eq.s32.totalorder %s12, 1
    %p116 = scmp.ne.s32.totalorder %s111, %s113
    %p117 = scmp.eq.s32.totalorder %s12, 0
    %p118 = por %p116, %p117
    %p119 = scmp.ne.s32.totalorder %s111, %s113
    %p120 = scmp.eq.s32.totalorder %s17, 1
    %p121 = por %p119, %p120
    %p122 = scmp.ne.s32.totalorder %s113, %s114
    %p123 = scmp.eq.s32.totalorder %s17, 0
    %p124 = por %p122, %p123
    %p125 = scmp.ne.s32.totalorder %s113, %s114
    %p126 = scmp.eq.s32.totalorder %s18, 1
    %p127 = por %p125, %p126
    %p129 = scmp.ne.s32.totalorder %s114, %s128
    %p130 = scmp.eq.s32.totalorder %s18, 0
    %p131 = por %p129, %p130
    %s132 = ssub.s32 %s19, %s38
    %s133 = ssub.s32 %s20, %s34
    %s134 = sor.u32 %s132, %s133
    %p135 = scmp.eq.s32.totalorder %s134, 0
    %s137 = sadd.s32 %s136, 1
    %s138 = scalar_select %p135, %s136, %s137
    %p141 = pneg %p135
    %p142 = scmp.eq.s32.totalorder %s12, 1
    %p143 = por %p141, %p142
    %p144 = scmp.ne.s32.totalorder %s136, %s139
    %p145 = scmp.eq.s32.totalorder %s12, 0
    %p146 = por %p144, %p145
    %p147 = scmp.ne.s32.totalorder %s136, %s139
    %p148 = scmp.eq.s32.totalorder %s17, 1
    %p149 = por %p147, %p148
    %p150 = scmp.ne.s32.totalorder %s139, %s140
    %p151 = scmp.eq.s32.totalorder %s17, 0
    %p152 = por %p150, %p151
    %p153 = scmp.ne.s32.totalorder %s139, %s140
    %p154 = scmp.eq.s32.totalorder %s18, 1
    %p155 = por %p153, %p154
    %p157 = scmp.ne.s32.totalorder %s140, %s156
    %p158 = scmp.eq.s32.totalorder %s18, 0
    %p159 = por %p157, %p158
    %s160 = ssub.s32 %s19, %s38
    %s161 = ssub.s32 %s20, %s34
    %s162 = sor.u32 %s160, %s161
    %p163 = scmp.eq.s32.totalorder %s162, 0
    %s165 = sadd.s32 %s164, 1
    %s166 = scalar_select %p163, %s164, %s165
    %p169 = pneg %p163
    %p170 = scmp.eq.s32.totalorder %s12, 1
    %p171 = por %p169, %p170
    %p172 = scmp.ne.s32.totalorder %s164, %s167
    %p173 = scmp.eq.s32.totalorder %s12, 0
    %p174 = por %p172, %p173
    %p175 = scmp.ne.s32.totalorder %s164, %s167
    %p176 = scmp.eq.s32.totalorder %s17, 1
    %p177 = por %p175, %p176
    %p178 = scmp.ne.s32.totalorder %s167, %s168
    %p179 = scmp.eq.s32.totalorder %s17, 0
    %p180 = por %p178, %p179
    %p181 = scmp.ne.s32.totalorder %s167, %s168
    %p182 = scmp.eq.s32.totalorder %s18, 1
    %p183 = por %p181, %p182
    %p185 = scmp.ne.s32.totalorder %s168, %s184
    %p186 = scmp.eq.s32.totalorder %s18, 0
    %p187 = por %p185, %p186
    %p188 = scmp.le.s32.totalorder 1, %s12
    %p189 = scmp.lt.s32.totalorder %s12, 3
    %p190 = pnand %p188, %p189
    %p191 = pneg %p190
    // Predicated region
    $region9: #{conv2d_channel_forward.4} parent=5 // pred_check
      _
    $region10: #{conv2d_channel_forward.4} parent=5 // pred_check_branch
      %193 = sbr.rel (%p190) target = $region12
    $region11: #{conv2d_channel_forward.4} parent=5 // pred_region
      %s194 = ssub.s32 %s12, 1
      // Predicated region
      $region13: #{conv2d_channel_forward.4} parent=11 // pred_check
        %p195 = pneg %p82
      $region14: #{conv2d_channel_forward.4} parent=11 // pred_check_branch
        %197 = sbr.rel (%p195) target = $region16
      $region15: #{conv2d_channel_forward.4} parent=11 // pred_region
        _
      $region16: #{conv2d_channel_forward.4} parent=11 // pred_fallthru
        _
      // Predicated region
      $region17: #{conv2d_channel_forward.4} parent=11 // pred_check
        %p198 = pneg %p103
      $region18: #{conv2d_channel_forward.4} parent=11 // pred_check_branch
        %200 = sbr.rel (%p198) target = $region20
      $region19: #{conv2d_channel_forward.4} parent=11 // pred_region
        _
      $region20: #{conv2d_channel_forward.4} parent=11 // pred_fallthru
        _
      // Predicated region
      $region21: #{conv2d_channel_forward.4} parent=11 // pred_check
        %p201 = pneg %p124
      $region22: #{conv2d_channel_forward.4} parent=11 // pred_check_branch
        %203 = sbr.rel (%p201) target = $region24
      $region23: #{conv2d_channel_forward.4} parent=11 // pred_region
        _
      $region24: #{conv2d_channel_forward.4} parent=11 // pred_fallthru
        _
    $region12: #{conv2d_channel_forward.4} parent=5 // pred_fallthru
      _
    %p204 = scmp.lt.s32.totalorder %s12, 2
    // Predicated region
    $region25: #{conv2d_channel_forward.4} parent=5 // pred_check
      %p205 = pneg %p204
    $region26: #{conv2d_channel_forward.4} parent=5 // pred_check_branch
      %207 = sbr.rel (%p205) target = $region28
    $region27: #{conv2d_channel_forward.4} parent=5 // pred_region
      // Predicated region
      $region29: #{conv2d_channel_forward.4} parent=27 // pred_check
        %p208 = pneg %p55
      $region30: #{conv2d_channel_forward.4} parent=27 // pred_check_branch
        %210 = sbr.rel (%p208) target = $region32
      $region31: #{conv2d_channel_forward.4} parent=27 // pred_region
        %s211 = sadd.s32 %s20, %s21
        %s212 = smul.u32 2, %s211
        %p213 = scmp.lt.s32.totalorder %s19, 1
        %s214 = scalar_select %p213, %s19, 1
        %p215 = scmp.lt.s32.totalorder %s212, 1
        %s216 = scalar_select %p215, %s212, 1
        %s217 = smul.addr %s214, 2
        %s218 = sadd.s32 %s216, %s217
        %s219 = smul.addr %s218, 4
        %s220 = scalar_lea.vmem %s0, %s219
        %s221 = sadd.s32 %s20, %s21
        %s222 = smul.u32 2, %s221
      $region32: #{conv2d_channel_forward.4} parent=27 // pred_fallthru
        _
    $region28: #{conv2d_channel_forward.4} parent=5 // pred_fallthru
      _
    %p223 = scmp.le.s32.totalorder 1, %s12
    %p224 = scmp.lt.s32.totalorder %s12, 3
    %p225 = pnand %p223, %p224
    %p226 = pneg %p225
    // Predicated region
    $region33: #{conv2d_channel_forward.4} parent=5 // pred_check
      _
    $region34: #{conv2d_channel_forward.4} parent=5 // pred_check_branch
      %228 = sbr.rel (%p225) target = $region36
    $region35: #{conv2d_channel_forward.4} parent=5 // pred_region
      %s229 = ssub.s32 %s12, 1
      %s230 = sadd.s32 %s23, %s24
      %s231 = smul.u32 2, %s230
      %p232 = scmp.lt.s32.totalorder %s22, 1
      %s233 = scalar_select %p232, %s22, 1
      %p234 = scmp.lt.s32.totalorder %s231, 1
      %s235 = scalar_select %p234, %s231, 1
      %s236 = smul.addr %s233, 2
      %s237 = sadd.s32 %s235, %s236
      %s238 = smul.addr %s237, 4
      %s239 = scalar_lea.vmem %s0, %s238
      %p240 = pneg %p61
      %p241 = pneg %p58
      %p242 = pneg %p82
      %p243 = pneg %p79
      %p244 = pneg %p103
      %p245 = pneg %p100
      %p246 = pneg %p124
      %p247 = pneg %p121
      %p248 = pneg %p152
      %p249 = pneg %p149
      %p250 = scmp.lt.s32.totalorder %s22, 1
      %s251 = scalar_select %p250, %s22, 1
      %p252 = scmp.lt.s32.totalorder %s23, 0
      %s253 = scalar_select %p252, %s23, 0
      %s254 = smul.addr %s253, 2
      %s255 = smul.addr %s251, 2
      %s256 = sadd.s32 %s254, %s255
      %s257 = smul.addr %s256, 8
      %s258 = scalar_lea.vmem %s4, %s257
      %p259 = pneg %p180
      %p260 = pneg %p177
      %p261 = scmp.lt.s32.totalorder %s22, 1
      %s262 = scalar_select %p261, %s22, 1
      %p263 = scmp.lt.s32.totalorder %s23, 0
      %s264 = scalar_select %p263, %s23, 0
      %s265 = smul.addr %s264, 2
      %s266 = smul.addr %s262, 2
      %s267 = sadd.s32 %s265, %s266
      %s268 = smul.addr %s267, 8
      %s269 = scalar_lea.vmem %s5, %s268
      %s270 = sadd.s32 %s23, %s24
      %s271 = smul.u32 2, %s270
      %p272 = scmp.lt.s32.totalorder %s22, 1
      %s273 = scalar_select %p272, %s22, 1
      %p274 = scmp.lt.s32.totalorder %s271, 1
      %s275 = scalar_select %p274, %s271, 1
      %s276 = smul.addr %s273, 2
      %s277 = sadd.s32 %s275, %s276
      %s278 = smul.addr %s277, 4
      %s279 = scalar_lea.vmem %s0, %s278
      %s280 = sadd.s32 %s23, %s24
      %s281 = smul.u32 2, %s280
      %p282 = scmp.lt.s32.totalorder %s22, 1
      %s283 = scalar_select %p282, %s22, 1
      %p284 = scmp.lt.s32.totalorder %s23, 0
      %s285 = scalar_select %p284, %s23, 0
      %s286 = smul.addr %s285, 2
      %s287 = smul.addr %s283, 2
      %s288 = sadd.s32 %s286, %s287
      %s289 = smul.addr %s288, 8
      %s290 = scalar_lea.vmem %s4, %s289
      %p291 = scmp.lt.s32.totalorder %s22, 1
      %s292 = scalar_select %p291, %s22, 1
      %p293 = scmp.lt.s32.totalorder %s23, 0
      %s294 = scalar_select %p293, %s23, 0
      %s295 = smul.addr %s294, 2
      %s296 = smul.addr %s292, 2
      %s297 = sadd.s32 %s295, %s296
      %s298 = smul.addr %s297, 8
      %s299 = scalar_lea.vmem %s5, %s298
      %p300 = scmp.eq.s32.totalorder %s24, 0
      // Predicated region
      $region37: #{conv2d_channel_forward.4} parent=35 // pred_check
        %p301 = pneg %p300
      $region38: #{conv2d_channel_forward.4} parent=35 // pred_check_branch
        %303 = sbr.rel (%p301) target = $region40
      $region39: #{conv2d_channel_forward.4} parent=35 // pred_region
        %vm304 = vcmask 7168
        %305 = vst.msk [vmem:[%s290] sm:$0xff] %vm304, 0.0
        %306 = vst.msk [vmem:[%s290 + $0x8] sm:$0xff] %vm304, 0.0
        %307 = vst.msk [vmem:[%s299] sm:$0xff] %vm304, 0.0
        %308 = vst.msk [vmem:[%s299 + $0x8] sm:$0xff] %vm304, 0.0
      $region40: #{conv2d_channel_forward.4} parent=35 // pred_fallthru
        _
      %v309 = vld [vmem:[%s279] sm:$0xff]
      %v310 = vld [vmem:[%s1] sm:$0xff]
      %v311 = vld [vmem:[%s1 + $0x8] sm:$0xff]
      %313 = vst [vmem:[#allocation1] ss:$2 sm:$0xff] %v309
      %v314 = vld.sshfl [vmem:[#allocation1] sm:$0xff pattern:$0x75316420]
      %v315 = vld.sshfl [vmem:[#allocation1 + $0x8] sm:$0xff pattern:$0x75316420]
      %vm316 = vcmask 31744
      %v318 = vsel %vm316, %v310, 0
      %v321 = vsel %vm316, %v311, 0
      %vm323 = vcmask 1043456
      %v324 = vsel %vm323, %v314, 0
      %v326 = vsel %vm323, %v315, 0
      %328 = vmatpush.msra.mxu0 0.0
      %329 = vmatpush.msra.mxu0 0.0
      %330 = vmatpush.msra.mxu0 0.0
      %331 = vmatpush.msra.mxu0 0.0
      %332 = vmatpush.msra.mxu0 0.0
      %333 = vmatpush.msra.mxu0 0.0
      %334 = vmatpush.msra.mxu0 0.0
      %335 = vmatpush.msra.mxu0 0.0
      %336 = vmatpush.msra.mxu0 0.0
      %337 = vmatpush.msra.mxu0 0.0
      %338 = vmatpush.msra.mxu0 0.0
      %339 = vmatpush.msra.mxu0 0.0
      %340 = vmatpush.msra.mxu0 0.0
      %341 = vmatpush.msra.mxu0 0.0
      %342 = vmatpush.msra.mxu0 0.0
      %v343 = vand.u32 %v324, 4294901760
      %344 = vmatpush.msra.mxu0 %v343
      %v345 = vand.u32 %v318, 4294901760
      %v346 = vsub.f32 %v318, %v345
      %v347 = vand.u32 %v346, 4294901760
      %v348 = vsub.f32 %v346, %v347
      %v349 = vand.u32 %v348, 4294901760
      %350 = vmatmul.f32.gmra.mxu0 %v349
      %v351 = vpop.f32.mrf.mxu0
      %v352 = vadd.f32 0.0, %v351
      %v353 = vand.u32 %v321, 4294901760
      %v354 = vsub.f32 %v321, %v353
      %v355 = vand.u32 %v354, 4294901760
      %v356 = vsub.f32 %v354, %v355
      %v357 = vand.u32 %v356, 4294901760
      %358 = vmatmul.f32.gmra.mxu0 %v357
      %v359 = vpop.f32.mrf.mxu0
      %v360 = vadd.f32 0.0, %v359
      %361 = vdwg.mxu0
      %362 = vmatpush.msra.mxu0 0.0
      %363 = vmatpush.msra.mxu0 0.0
      %364 = vmatpush.msra.mxu0 0.0
      %365 = vmatpush.msra.mxu0 0.0
      %366 = vmatpush.msra.mxu0 0.0
      %367 = vmatpush.msra.mxu0 0.0
      %368 = vmatpush.msra.mxu0 0.0
      %369 = vmatpush.msra.mxu0 0.0
      %370 = vmatpush.msra.mxu0 0.0
      %371 = vmatpush.msra.mxu0 0.0
      %372 = vmatpush.msra.mxu0 0.0
      %373 = vmatpush.msra.mxu0 0.0
      %374 = vmatpush.msra.mxu0 0.0
      %375 = vmatpush.msra.mxu0 0.0
      %376 = vmatpush.msra.mxu0 0.0
      %v377 = vand.u32 %v324, 4294901760
      %v378 = vsub.f32 %v324, %v377
      %v379 = vand.u32 %v378, 4294901760
      %v380 = vsub.f32 %v378, %v379
      %v381 = vand.u32 %v380, 4294901760
      %382 = vmatpush.msra.mxu0 %v381
      %v383 = vand.u32 %v318, 4294901760
      %384 = vmatmul.f32.gmra.mxu0 %v383
      %v385 = vpop.f32.mrf.mxu0
      %v386 = vadd.f32 %v352, %v385
      %v387 = vand.u32 %v321, 4294901760
      %388 = vmatmul.f32.gmra.mxu0 %v387
      %v389 = vpop.f32.mrf.mxu0
      %v390 = vadd.f32 %v360, %v389
      %391 = vdwg.mxu0
      %392 = vmatpush.msra.mxu0 0.0
      %393 = vmatpush.msra.mxu0 0.0
      %394 = vmatpush.msra.mxu0 0.0
      %395 = vmatpush.msra.mxu0 0.0
      %396 = vmatpush.msra.mxu0 0.0
      %397 = vmatpush.msra.mxu0 0.0
      %398 = vmatpush.msra.mxu0 0.0
      %399 = vmatpush.msra.mxu0 0.0
      %400 = vmatpush.msra.mxu0 0.0
      %401 = vmatpush.msra.mxu0 0.0
      %402 = vmatpush.msra.mxu0 0.0
      %403 = vmatpush.msra.mxu0 0.0
      %404 = vmatpush.msra.mxu0 0.0
      %405 = vmatpush.msra.mxu0 0.0
      %406 = vmatpush.msra.mxu0 0.0
      %v407 = vand.u32 %v324, 4294901760
      %v408 = vsub.f32 %v324, %v407
      %409 = vmatpush.msra.mxu0 %v408
      %v410 = vand.u32 %v318, 4294901760
      %v411 = vsub.f32 %v318, %v410
      %412 = vmatmul.f32.gmra.mxu0 %v411
      %v413 = vpop.f32.mrf.mxu0
      %v414 = vadd.f32 %v386, %v413
      %v415 = vand.u32 %v321, 4294901760
      %v416 = vsub.f32 %v321, %v415
      %417 = vmatmul.f32.gmra.mxu0 %v416
      %v418 = vpop.f32.mrf.mxu0
      %v419 = vadd.f32 %v390, %v418
      %420 = vdwg.mxu0
      %421 = vmatpush.msra.mxu0 0.0
      %422 = vmatpush.msra.mxu0 0.0
      %423 = vmatpush.msra.mxu0 0.0
      %424 = vmatpush.msra.mxu0 0.0
      %425 = vmatpush.msra.mxu0 0.0
      %426 = vmatpush.msra.mxu0 0.0
      %427 = vmatpush.msra.mxu0 0.0
      %428 = vmatpush.msra.mxu0 0.0
      %429 = vmatpush.msra.mxu0 0.0
      %430 = vmatpush.msra.mxu0 0.0
      %431 = vmatpush.msra.mxu0 0.0
      %432 = vmatpush.msra.mxu0 0.0
      %433 = vmatpush.msra.mxu0 0.0
      %434 = vmatpush.msra.mxu0 0.0
      %435 = vmatpush.msra.mxu0 0.0
      %v436 = vand.u32 %v324, 4294901760
      %437 = vmatpush.msra.mxu0 %v436
      %v438 = vand.u32 %v318, 4294901760
      %v439 = vsub.f32 %v318, %v438
      %v440 = vand.u32 %v439, 4294901760
      %441 = vmatmul.f32.gmra.mxu0 %v440
      %v442 = vpop.f32.mrf.mxu0
      %v443 = vadd.f32 %v414, %v442
      %v444 = vand.u32 %v321, 4294901760
      %v445 = vsub.f32 %v321, %v444
      %v446 = vand.u32 %v445, 4294901760
      %447 = vmatmul.f32.gmra.mxu0 %v446
      %v448 = vpop.f32.mrf.mxu0
      %v449 = vadd.f32 %v419, %v448
      %450 = vdwg.mxu0
      %451 = vmatpush.msra.mxu0 0.0
      %452 = vmatpush.msra.mxu0 0.0
      %453 = vmatpush.msra.mxu0 0.0
      %454 = vmatpush.msra.mxu0 0.0
      %455 = vmatpush.msra.mxu0 0.0
      %456 = vmatpush.msra.mxu0 0.0
      %457 = vmatpush.msra.mxu0 0.0
      %458 = vmatpush.msra.mxu0 0.0
      %459 = vmatpush.msra.mxu0 0.0
      %460 = vmatpush.msra.mxu0 0.0
      %461 = vmatpush.msra.mxu0 0.0
      %462 = vmatpush.msra.mxu0 0.0
      %463 = vmatpush.msra.mxu0 0.0
      %464 = vmatpush.msra.mxu0 0.0
      %465 = vmatpush.msra.mxu0 0.0
      %v466 = vand.u32 %v324, 4294901760
      %v467 = vsub.f32 %v324, %v466
      %v468 = vand.u32 %v467, 4294901760
      %469 = vmatpush.msra.mxu0 %v468
      %v470 = vand.u32 %v318, 4294901760
      %471 = vmatmul.f32.gmra.mxu0 %v470
      %v472 = vpop.f32.mrf.mxu0
      %v473 = vadd.f32 %v443, %v472
      %v474 = vand.u32 %v321, 4294901760
      %475 = vmatmul.f32.gmra.mxu0 %v474
      %v476 = vpop.f32.mrf.mxu0
      %v477 = vadd.f32 %v449, %v476
      %478 = vdwg.mxu0
      %479 = vmatpush.msra.mxu0 0.0
      %480 = vmatpush.msra.mxu0 0.0
      %481 = vmatpush.msra.mxu0 0.0
      %482 = vmatpush.msra.mxu0 0.0
      %483 = vmatpush.msra.mxu0 0.0
      %484 = vmatpush.msra.mxu0 0.0
      %485 = vmatpush.msra.mxu0 0.0
      %486 = vmatpush.msra.mxu0 0.0
      %487 = vmatpush.msra.mxu0 0.0
      %488 = vmatpush.msra.mxu0 0.0
      %489 = vmatpush.msra.mxu0 0.0
      %490 = vmatpush.msra.mxu0 0.0
      %491 = vmatpush.msra.mxu0 0.0
      %492 = vmatpush.msra.mxu0 0.0
      %493 = vmatpush.msra.mxu0 0.0
      %v494 = vand.u32 %v324, 4294901760
      %495 = vmatpush.msra.mxu0 %v494
      %v496 = vand.u32 %v318, 4294901760
      %497 = vmatmul.f32.gmra.mxu0 %v496
      %v498 = vpop.f32.mrf.mxu0
      %v499 = vadd.f32 %v473, %v498
      %v500 = vand.u32 %v321, 4294901760
      %501 = vmatmul.f32.gmra.mxu0 %v500
      %v502 = vpop.f32.mrf.mxu0
      %v503 = vadd.f32 %v477, %v502
      %504 = vdwg.mxu0
      %505 = vmatpush.msra.mxu0 0.0
      %506 = vmatpush.msra.mxu0 0.0
      %507 = vmatpush.msra.mxu0 0.0
      %508 = vmatpush.msra.mxu0 0.0
      %509 = vmatpush.msra.mxu0 0.0
      %510 = vmatpush.msra.mxu0 0.0
      %511 = vmatpush.msra.mxu0 0.0
      %512 = vmatpush.msra.mxu0 0.0
      %513 = vmatpush.msra.mxu0 0.0
      %514 = vmatpush.msra.mxu0 0.0
      %515 = vmatpush.msra.mxu0 0.0
      %516 = vmatpush.msra.mxu0 0.0
      %517 = vmatpush.msra.mxu0 0.0
      %518 = vmatpush.msra.mxu0 0.0
      %519 = vmatpush.msra.mxu0 0.0
      %v520 = vand.u32 %v326, 4294901760
      %521 = vmatpush.msra.mxu0 %v520
      %v522 = vand.u32 %v318, 4294901760
      %v523 = vsub.f32 %v318, %v522
      %v524 = vand.u32 %v523, 4294901760
      %v525 = vsub.f32 %v523, %v524
      %v526 = vand.u32 %v525, 4294901760
      %527 = vmatmul.f32.gmra.mxu0 %v526
      %v528 = vpop.f32.mrf.mxu0
      %v529 = vadd.f32 0.0, %v528
      %v530 = vand.u32 %v321, 4294901760
      %v531 = vsub.f32 %v321, %v530
      %v532 = vand.u32 %v531, 4294901760
      %v533 = vsub.f32 %v531, %v532
      %v534 = vand.u32 %v533, 4294901760
      %535 = vmatmul.f32.gmra.mxu0 %v534
      %v536 = vpop.f32.mrf.mxu0
      %v537 = vadd.f32 0.0, %v536
      %538 = vdwg.mxu0
      %539 = vmatpush.msra.mxu0 0.0
      %540 = vmatpush.msra.mxu0 0.0
      %541 = vmatpush.msra.mxu0 0.0
      %542 = vmatpush.msra.mxu0 0.0
      %543 = vmatpush.msra.mxu0 0.0
      %544 = vmatpush.msra.mxu0 0.0
      %545 = vmatpush.msra.mxu0 0.0
      %546 = vmatpush.msra.mxu0 0.0
      %547 = vmatpush.msra.mxu0 0.0
      %548 = vmatpush.msra.mxu0 0.0
      %549 = vmatpush.msra.mxu0 0.0
      %550 = vmatpush.msra.mxu0 0.0
      %551 = vmatpush.msra.mxu0 0.0
      %552 = vmatpush.msra.mxu0 0.0
      %553 = vmatpush.msra.mxu0 0.0
      %v554 = vand.u32 %v326, 4294901760
      %v555 = vsub.f32 %v326, %v554
      %v556 = vand.u32 %v555, 4294901760
      %v557 = vsub.f32 %v555, %v556
      %v558 = vand.u32 %v557, 4294901760
      %559 = vmatpush.msra.mxu0 %v558
      %v560 = vand.u32 %v318, 4294901760
      %561 = vmatmul.f32.gmra.mxu0 %v560
      %v562 = vpop.f32.mrf.mxu0
      %v563 = vadd.f32 %v529, %v562
      %v564 = vand.u32 %v321, 4294901760
      %565 = vmatmul.f32.gmra.mxu0 %v564
      %v566 = vpop.f32.mrf.mxu0
      %v567 = vadd.f32 %v537, %v566
      %568 = vdwg.mxu0
      %569 = vmatpush.msra.mxu0 0.0
      %570 = vmatpush.msra.mxu0 0.0
      %571 = vmatpush.msra.mxu0 0.0
      %572 = vmatpush.msra.mxu0 0.0
      %573 = vmatpush.msra.mxu0 0.0
      %574 = vmatpush.msra.mxu0 0.0
      %575 = vmatpush.msra.mxu0 0.0
      %576 = vmatpush.msra.mxu0 0.0
      %577 = vmatpush.msra.mxu0 0.0
      %578 = vmatpush.msra.mxu0 0.0
      %579 = vmatpush.msra.mxu0 0.0
      %580 = vmatpush.msra.mxu0 0.0
      %581 = vmatpush.msra.mxu0 0.0
      %582 = vmatpush.msra.mxu0 0.0
      %583 = vmatpush.msra.mxu0 0.0
      %v584 = vand.u32 %v326, 4294901760
      %v585 = vsub.f32 %v326, %v584
      %586 = vmatpush.msra.mxu0 %v585
      %v587 = vand.u32 %v318, 4294901760
      %v588 = vsub.f32 %v318, %v587
      %589 = vmatmul.f32.gmra.mxu0 %v588
      %v590 = vpop.f32.mrf.mxu0
      %v591 = vadd.f32 %v563, %v590
      %v592 = vand.u32 %v321, 4294901760
      %v593 = vsub.f32 %v321, %v592
      %594 = vmatmul.f32.gmra.mxu0 %v593
      %v595 = vpop.f32.mrf.mxu0
      %v596 = vadd.f32 %v567, %v595
      %597 = vdwg.mxu0
      %598 = vmatpush.msra.mxu0 0.0
      %599 = vmatpush.msra.mxu0 0.0
      %600 = vmatpush.msra.mxu0 0.0
      %601 = vmatpush.msra.mxu0 0.0
      %602 = vmatpush.msra.mxu0 0.0
      %603 = vmatpush.msra.mxu0 0.0
      %604 = vmatpush.msra.mxu0 0.0
      %605 = vmatpush.msra.mxu0 0.0
      %606 = vmatpush.msra.mxu0 0.0
      %607 = vmatpush.msra.mxu0 0.0
      %608 = vmatpush.msra.mxu0 0.0
      %609 = vmatpush.msra.mxu0 0.0
      %610 = vmatpush.msra.mxu0 0.0
      %611 = vmatpush.msra.mxu0 0.0
      %612 = vmatpush.msra.mxu0 0.0
      %v613 = vand.u32 %v326, 4294901760
      %614 = vmatpush.msra.mxu0 %v613
      %v615 = vand.u32 %v318, 4294901760
      %v616 = vsub.f32 %v318, %v615
      %v617 = vand.u32 %v616, 4294901760
      %618 = vmatmul.f32.gmra.mxu0 %v617
      %v619 = vpop.f32.mrf.mxu0
      %v620 = vadd.f32 %v591, %v619
      %v621 = vand.u32 %v321, 4294901760
      %v622 = vsub.f32 %v321, %v621
      %v623 = vand.u32 %v622, 4294901760
      %624 = vmatmul.f32.gmra.mxu0 %v623
      %v625 = vpop.f32.mrf.mxu0
      %v626 = vadd.f32 %v596, %v625
      %627 = vdwg.mxu0
      %628 = vmatpush.msra.mxu0 0.0
      %629 = vmatpush.msra.mxu0 0.0
      %630 = vmatpush.msra.mxu0 0.0
      %631 = vmatpush.msra.mxu0 0.0
      %632 = vmatpush.msra.mxu0 0.0
      %633 = vmatpush.msra.mxu0 0.0
      %634 = vmatpush.msra.mxu0 0.0
      %635 = vmatpush.msra.mxu0 0.0
      %636 = vmatpush.msra.mxu0 0.0
      %637 = vmatpush.msra.mxu0 0.0
      %638 = vmatpush.msra.mxu0 0.0
      %639 = vmatpush.msra.mxu0 0.0
      %640 = vmatpush.msra.mxu0 0.0
      %641 = vmatpush.msra.mxu0 0.0
      %642 = vmatpush.msra.mxu0 0.0
      %v643 = vand.u32 %v326, 4294901760
      %v644 = vsub.f32 %v326, %v643
      %v645 = vand.u32 %v644, 4294901760
      %646 = vmatpush.msra.mxu0 %v645
      %v647 = vand.u32 %v318, 4294901760
      %648 = vmatmul.f32.gmra.mxu0 %v647
      %v649 = vpop.f32.mrf.mxu0
      %v650 = vadd.f32 %v620, %v649
      %v651 = vand.u32 %v321, 4294901760
      %652 = vmatmul.f32.gmra.mxu0 %v651
      %v653 = vpop.f32.mrf.mxu0
      %v654 = vadd.f32 %v626, %v653
      %655 = vdwg.mxu0
      %656 = vmatpush.msra.mxu0 0.0
      %657 = vmatpush.msra.mxu0 0.0
      %658 = vmatpush.msra.mxu0 0.0
      %659 = vmatpush.msra.mxu0 0.0
      %660 = vmatpush.msra.mxu0 0.0
      %661 = vmatpush.msra.mxu0 0.0
      %662 = vmatpush.msra.mxu0 0.0
      %663 = vmatpush.msra.mxu0 0.0
      %664 = vmatpush.msra.mxu0 0.0
      %665 = vmatpush.msra.mxu0 0.0
      %666 = vmatpush.msra.mxu0 0.0
      %667 = vmatpush.msra.mxu0 0.0
      %668 = vmatpush.msra.mxu0 0.0
      %669 = vmatpush.msra.mxu0 0.0
      %670 = vmatpush.msra.mxu0 0.0
      %v671 = vand.u32 %v326, 4294901760
      %672 = vmatpush.msra.mxu0 %v671
      %v673 = vand.u32 %v318, 4294901760
      %674 = vmatmul.f32.gmra.mxu0 %v673
      %v675 = vpop.f32.mrf.mxu0
      %v676 = vadd.f32 %v650, %v675
      %v677 = vand.u32 %v321, 4294901760
      %678 = vmatmul.f32.gmra.mxu0 %v677
      %v679 = vpop.f32.mrf.mxu0
      %v680 = vadd.f32 %v654, %v679
      %681 = vdwg.mxu0
      %v682 = vld [vmem:[%s2] sm:$0xff]
      %v683 = vld [vmem:[%s2 + $0x8] sm:$0xff]
      %685 = vset.pattern.permute.xlu0 0
      %686 = vperm.xlu0 %685, %v682
      %v687 = vpop.permute.xlu0 %686
      %690 = vset.pattern.permute.xlu0 0
      %691 = vperm.xlu0 %690, %v683
      %v692 = vpop.permute.xlu0 %691
      %v694 = vmul.f32 %v499, %v687
      %v695 = vmul.f32 %v676, %v687
      %v696 = vmul.f32 %v503, %v692
      %v697 = vmul.f32 %v680, %v692
      %v698 = vld [vmem:[%s3] sm:$0xff]
      %v699 = vld [vmem:[%s3 + $0x8] sm:$0xff]
      %701 = vset.pattern.permute.xlu0 0
      %702 = vperm.xlu0 %701, %v698
      %v703 = vpop.permute.xlu0 %702
      %706 = vset.pattern.permute.xlu0 0
      %707 = vperm.xlu0 %706, %v699
      %v708 = vpop.permute.xlu0 %707
      %v710 = vadd.f32 %v694, %v703
      %v711 = vadd.f32 %v695, %v703
      %v712 = vadd.f32 %v696, %v708
      %v713 = vadd.f32 %v697, %v708
      %vm714 = vcmp.ge.f32.partialorder %v710, 0.0
      %vm715 = vcmp.ge.f32.partialorder %v711, 0.0
      %vm716 = vcmp.ge.f32.partialorder %v712, 0.0
      %vm717 = vcmp.ge.f32.partialorder %v713, 0.0
      %v718 = vmul.f32 %v710, 0.01
      %v719 = vmul.f32 %v711, 0.01
      %v720 = vmul.f32 %v712, 0.01
      %v721 = vmul.f32 %v713, 0.01
      %v722 = vsel %vm714, %v710, %v718
      %v723 = vsel %vm715, %v711, %v719
      %v724 = vsel %vm716, %v712, %v720
      %v725 = vsel %vm717, %v713, %v721
      %v726 = vld [vmem:[%s290] sm:$0xff]
      %v727 = vld [vmem:[%s290 + $0x8] sm:$0xff]
      %v728 = vadd.f32 %v722, %v723
      %729 = vadd.xlane.f32.xlu0 %v728
      %v730 = vpop.xlane.xlu0 %729
      %v731 = vadd.f32 %v724, %v725
      %732 = vadd.xlane.f32.xlu0 %v731
      %v733 = vpop.xlane.xlu0 %732
      %v734 = vadd.f32 %v726, %v730
      %v735 = vadd.f32 %v727, %v733
      %vm736 = vcmask 7168
      %737 = vst.msk [vmem:[%s290] sm:$0xff] %vm736, %v734
      %738 = vst.msk [vmem:[%s290 + $0x8] sm:$0xff] %vm736, %v735
      %v739 = vld [vmem:[%s299] sm:$0xff]
      %v740 = vld [vmem:[%s299 + $0x8] sm:$0xff]
      %v741 = vmul.f32 %v722, %v722
      %v742 = vmul.f32 %v723, %v723
      %v743 = vmul.f32 %v724, %v724
      %v744 = vmul.f32 %v725, %v725
      %v745 = vadd.f32 %v741, %v742
      %746 = vadd.xlane.f32.xlu0 %v745
      %v747 = vpop.xlane.xlu0 %746
      %v748 = vadd.f32 %v743, %v744
      %749 = vadd.xlane.f32.xlu0 %v748
      %v750 = vpop.xlane.xlu0 %749
      %v751 = vadd.f32 %v739, %v747
      %v752 = vadd.f32 %v740, %v750
      %753 = vst.msk [vmem:[%s299] sm:$0xff] %vm736, %v751
      %754 = vst.msk [vmem:[%s299 + $0x8] sm:$0xff] %vm736, %v752
      %p755 = scmp.lt.s32.totalorder %s22, 1
      %s756 = scalar_select %p755, %s22, 1
      %p757 = scmp.lt.s32.totalorder %s23, 0
      %s758 = scalar_select %p757, %s23, 0
      %s759 = smul.addr %s758, 2
      %s760 = smul.addr %s756, 2
      %s761 = sadd.s32 %s759, %s760
      %s762 = smul.addr %s761, 8
      %s763 = scalar_lea.vmem %s4, %s762
      %p764 = scmp.lt.s32.totalorder %s22, 1
      %s765 = scalar_select %p764, %s22, 1
      %p766 = scmp.lt.s32.totalorder %s23, 0
      %s767 = scalar_select %p766, %s23, 0
      %s768 = smul.addr %s767, 2
      %s769 = smul.addr %s765, 2
      %s770 = sadd.s32 %s768, %s769
      %s771 = smul.addr %s770, 8
      %s772 = scalar_lea.vmem %s5, %s771
      // Predicated region
      $region41: #{conv2d_channel_forward.4} parent=35 // pred_check
        %p773 = pneg %p149
      $region42: #{conv2d_channel_forward.4} parent=35 // pred_check_branch
        %775 = sbr.rel (%p773) target = $region44
      $region43: #{conv2d_channel_forward.4} parent=35 // pred_region
        _
      $region44: #{conv2d_channel_forward.4} parent=35 // pred_fallthru
        _
      // Predicated region
      $region45: #{conv2d_channel_forward.4} parent=35 // pred_check
        %p776 = pneg %p177
      $region46: #{conv2d_channel_forward.4} parent=35 // pred_check_branch
        %778 = sbr.rel (%p776) target = $region48
      $region47: #{conv2d_channel_forward.4} parent=35 // pred_region
        _
      $region48: #{conv2d_channel_forward.4} parent=35 // pred_fallthru
        _
    $region36: #{conv2d_channel_forward.4} parent=5 // pred_fallthru
      _
    %p779 = scmp.le.s32.totalorder 2, %s12
    // Predicated region
    $region49: #{conv2d_channel_forward.4} parent=5 // pred_check
      %p780 = pneg %p779
    $region50: #{conv2d_channel_forward.4} parent=5 // pred_check_branch
      %782 = sbr.rel (%p780) target = $region52
    $region51: #{conv2d_channel_forward.4} parent=5 // pred_region
      %s783 = ssub.s32 %s12, 2
      // Predicated region
      $region53: #{conv2d_channel_forward.4} parent=51 // pred_check
        %p784 = pneg %p155
      $region54: #{conv2d_channel_forward.4} parent=51 // pred_check_branch
        %786 = sbr.rel (%p784) target = $region56
      $region55: #{conv2d_channel_forward.4} parent=51 // pred_region
        %p787 = scmp.lt.s32.totalorder %s25, 1
        %s788 = scalar_select %p787, %s25, 1
        %p789 = scmp.lt.s32.totalorder %s26, 0
        %s790 = scalar_select %p789, %s26, 0
        %s791 = smul.addr %s790, 2
        %s792 = smul.addr %s788, 2
        %s793 = sadd.s32 %s791, %s792
        %s794 = smul.addr %s793, 8
        %s795 = scalar_lea.vmem %s4, %s794
      $region56: #{conv2d_channel_forward.4} parent=51 // pred_fallthru
        _
      // Predicated region
      $region57: #{conv2d_channel_forward.4} parent=51 // pred_check
        %p796 = pneg %p183
      $region58: #{conv2d_channel_forward.4} parent=51 // pred_check_branch
        %798 = sbr.rel (%p796) target = $region60
      $region59: #{conv2d_channel_forward.4} parent=51 // pred_region
        %p799 = scmp.lt.s32.totalorder %s25, 1
        %s800 = scalar_select %p799, %s25, 1
        %p801 = scmp.lt.s32.totalorder %s26, 0
        %s802 = scalar_select %p801, %s26, 0
        %s803 = smul.addr %s802, 2
        %s804 = smul.addr %s800, 2
        %s805 = sadd.s32 %s803, %s804
        %s806 = smul.addr %s805, 8
        %s807 = scalar_lea.vmem %s5, %s806
      $region60: #{conv2d_channel_forward.4} parent=51 // pred_fallthru
        _
    $region52: #{conv2d_channel_forward.4} parent=5 // pred_fallthru
      _
  $region6: #{conv2d_channel_forward.4} parent=0 // loop_footer
    %s16 = sadd.s32 1, %s12
  $region7: #{conv2d_channel_forward.4} parent=0 // loop_footer_branch
    %11 = sbr.rel target = $region3
  $region8: #{conv2d_channel_forward.4} parent=0 // loop_exit
    _

// kernel: conv2d_channel_forward.5
$region0: #{conv2d_channel_forward.5}
  #allocation0 [shape = 'u32[]', space=smem, size = 0x4, offset = 0x4, fixed_abs, tag = 'smem constant byte address 0x4 - core index']
  #allocation1 [shape = 'u32[72,128]{1,0:T(1,128)}', space=vmem, size = 0x9000, scoped, tag = 'internal scratch']
  %s0 = inlined_call_operand.vmem [shape: f32[2,4,256], index: 0, kind: input, shape index: {}]
  %s1 = inlined_call_operand.vmem [shape: f32[16,4], index: 1, kind: input, shape index: {}]
  %s2 = inlined_call_operand.vmem [shape: f32[16,1], index: 2, kind: input, shape index: {}]
  %s3 = inlined_call_operand.vmem [shape: f32[16,1], index: 3, kind: input, shape index: {}]
  %s4 = inlined_call_operand.vmem [shape: f32[2,16,1], index: 4, kind: input, shape index: {}]
  %s5 = inlined_call_operand.vmem [shape: f32[16,1], index: 5, kind: input, shape index: {}]
  %s6 = inlined_call_operand.vmem [shape: f32[2,16,256], index: 6, kind: output, shape index: {}]
  %s7 = sld [smem:[#allocation0]]
  $region57: #{conv2d_channel_forward.5} parent=0
    _
  %s9 = ssub.s32 1, %s7
  %s10 = scalar_select 0, %s9, %s7
  loop: start=0, step=1, limit=4
  $region2: #{conv2d_channel_forward.5} parent=0 // loop_pre_header
    _
  $region3: #{conv2d_channel_forward.5} parent=0 // loop_header
    %s12 = sphi 0, %s16
    %p13 = scmp.ge.s32.totalorder %s12, 4
    %s19 = sphi 0, %s31
    %s20 = sphi 0, %s27
    %s21 = sphi 0, %s19
    %s22 = sphi 0, %s20
    %s23 = sphi 0, %s21
    %s24 = sphi 0, %s22
    %s36 = sphi 0, %s38
    %s39 = sphi 0, %s36
    %s40 = sphi 0, %s39
    %s56 = sphi 0, %s40
    %s60 = sphi 0, %s60
    %s62 = sphi 0, %s60
    %s63 = sphi 0, %s62
    %s77 = sphi 0, %s63
    %s81 = sphi 0, %s81
    %s83 = sphi 0, %s81
    %s84 = sphi 0, %s83
    %s98 = sphi 0, %s84
    %s102 = sphi 0, %s102
    %s104 = sphi 0, %s102
    %s105 = sphi 0, %s104
    %s119 = sphi 0, %s105
    %s125 = sphi 0, %s127
    %s128 = sphi 0, %s125
    %s129 = sphi 0, %s128
    %s145 = sphi 0, %s129
    %s149 = sphi 0, %s149
    %s151 = sphi 0, %s149
    %s152 = sphi 0, %s151
    %s166 = sphi 0, %s152
    %s174 = sphi 0, %s176
    %s177 = sphi 0, %s174
    %s178 = sphi 0, %s177
    %s194 = sphi 0, %s178
  $region4: #{conv2d_channel_forward.5} parent=0 // loop_header_branch
    %15 = sbr.rel (%p13) target = $region8
  $region5: #{conv2d_channel_forward.5} parent=0 // loop_body
    %s17 = ssub.s32 %s12, 1
    %s18 = ssub.s32 %s12, 2
    %s25 = sadd.s32 1, %s20
    %p26 = scmp.ge.s32.totalorder %s25, 1
    %s27 = scalar_select %p26, 0, %s25
    %s28 = sadd.s32 1, %s19
    %s29 = scalar_select %p26, %s28, %s19
    %p30 = scmp.ge.s32.totalorder %s29, 2
    %s31 = scalar_select %p30, 0, %s29
    %s32 = ssub.s32 %s19, %s31
    %s33 = ssub.s32 %s20, %s27
    %s34 = sor.u32 %s32, %s33
    %p35 = scmp.eq.s32.totalorder %s34, 0
    %s37 = sadd.s32 %s36, 1
    %s38 = scalar_select %p35, %s36, %s37
    %p41 = pneg %p35
    %p42 = scmp.eq.s32.totalorder %s12, 1
    %p43 = por %p41, %p42
    %p44 = scmp.ne.s32.totalorder %s36, %s39
    %p45 = scmp.eq.s32.totalorder %s12, 0
    %p46 = por %p44, %p45
    %p47 = scmp.ne.s32.totalorder %s36, %s39
    %p48 = scmp.eq.s32.totalorder %s17, 1
    %p49 = por %p47, %p48
    %p50 = scmp.ne.s32.totalorder %s39, %s40
    %p51 = scmp.eq.s32.totalorder %s17, 0
    %p52 = por %p50, %p51
    %p53 = scmp.ne.s32.totalorder %s39, %s40
    %p54 = scmp.eq.s32.totalorder %s18, 1
    %p55 = por %p53, %p54
    %p57 = scmp.ne.s32.totalorder %s40, %s56
    %p58 = scmp.eq.s32.totalorder %s18, 0
    %p59 = por %p57, %p58
    %s61 = sadd.s32 %s60, 1
    %p64 = scmp.eq.s32.totalorder %s12, 1
    %p65 = scmp.ne.s32.totalorder %s60, %s62
    %p66 = scmp.eq.s32.totalorder %s12, 0
    %p67 = por %p65, %p66
    %p68 = scmp.ne.s32.totalorder %s60, %s62
    %p69 = scmp.eq.s32.totalorder %s17, 1
    %p70 = por %p68, %p69
    %p71 = scmp.ne.s32.totalorder %s62, %s63
    %p72 = scmp.eq.s32.totalorder %s17, 0
    %p73 = por %p71, %p72
    %p74 = scmp.ne.s32.totalorder %s62, %s63
    %p75 = scmp.eq.s32.totalorder %s18, 1
    %p76 = por %p74, %p75
    %p78 = scmp.ne.s32.totalorder %s63, %s77
    %p79 = scmp.eq.s32.totalorder %s18, 0
    %p80 = por %p78, %p79
    %s82 = sadd.s32 %s81, 1
    %p85 = scmp.eq.s32.totalorder %s12, 1
    %p86 = scmp.ne.s32.totalorder %s81, %s83
    %p87 = scmp.eq.s32.totalorder %s12, 0
    %p88 = por %p86, %p87
    %p89 = scmp.ne.s32.totalorder %s81, %s83
    %p90 = scmp.eq.s32.totalorder %s17, 1
    %p91 = por %p89, %p90
    %p92 = scmp.ne.s32.totalorder %s83, %s84
    %p93 = scmp.eq.s32.totalorder %s17, 0
    %p94 = por %p92, %p93
    %p95 = scmp.ne.s32.totalorder %s83, %s84
    %p96 = scmp.eq.s32.totalorder %s18, 1
    %p97 = por %p95, %p96
    %p99 = scmp.ne.s32.totalorder %s84, %s98
    %p100 = scmp.eq.s32.totalorder %s18, 0
    %p101 = por %p99, %p100
    %s103 = sadd.s32 %s102, 1
    %p106 = scmp.eq.s32.totalorder %s12, 1
    %p107 = scmp.ne.s32.totalorder %s102, %s104
    %p108 = scmp.eq.s32.totalorder %s12, 0
    %p109 = por %p107, %p108
    %p110 = scmp.ne.s32.totalorder %s102, %s104
    %p111 = scmp.eq.s32.totalorder %s17, 1
    %p112 = por %p110, %p111
    %p113 = scmp.ne.s32.totalorder %s104, %s105
    %p114 = scmp.eq.s32.totalorder %s17, 0
    %p115 = por %p113, %p114
    %p116 = scmp.ne.s32.totalorder %s104, %s105
    %p117 = scmp.eq.s32.totalorder %s18, 1
    %p118 = por %p116, %p117
    %p120 = scmp.ne.s32.totalorder %s105, %s119
    %p121 = scmp.eq.s32.totalorder %s18, 0
    %p122 = por %p120, %p121
    %s123 = ssub.s32 %s19, %s31
    %p124 = scmp.eq.s32.totalorder %s123, 0
    %s126 = sadd.s32 %s125, 1
    %s127 = scalar_select %p124, %s125, %s126
    %p130 = pneg %p124
    %p131 = scmp.eq.s32.totalorder %s12, 1
    %p132 = por %p130, %p131
    %p133 = scmp.ne.s32.totalorder %s125, %s128
    %p134 = scmp.eq.s32.totalorder %s12, 0
    %p135 = por %p133, %p134
    %p136 = scmp.ne.s32.totalorder %s125, %s128
    %p137 = scmp.eq.s32.totalorder %s17, 1
    %p138 = por %p136, %p137
    %p139 = scmp.ne.s32.totalorder %s128, %s129
    %p140 = scmp.eq.s32.totalorder %s17, 0
    %p141 = por %p139, %p140
    %p142 = scmp.ne.s32.totalorder %s128, %s129
    %p143 = scmp.eq.s32.totalorder %s18, 1
    %p144 = por %p142, %p143
    %p146 = scmp.ne.s32.totalorder %s129, %s145
    %p147 = scmp.eq.s32.totalorder %s18, 0
    %p148 = por %p146, %p147
    %s150 = sadd.s32 %s149, 1
    %p153 = scmp.eq.s32.totalorder %s12, 1
    %p154 = scmp.ne.s32.totalorder %s149, %s151
    %p155 = scmp.eq.s32.totalorder %s12, 0
    %p156 = por %p154, %p155
    %p157 = scmp.ne.s32.totalorder %s149, %s151
    %p158 = scmp.eq.s32.totalorder %s17, 1
    %p159 = por %p157, %p158
    %p160 = scmp.ne.s32.totalorder %s151, %s152
    %p161 = scmp.eq.s32.totalorder %s17, 0
    %p162 = por %p160, %p161
    %p163 = scmp.ne.s32.totalorder %s151, %s152
    %p164 = scmp.eq.s32.totalorder %s18, 1
    %p165 = por %p163, %p164
    %p167 = scmp.ne.s32.totalorder %s152, %s166
    %p168 = scmp.eq.s32.totalorder %s18, 0
    %p169 = por %p167, %p168
    %s170 = ssub.s32 %s19, %s31
    %s171 = ssub.s32 %s20, %s27
    %s172 = sor.u32 %s170, %s171
    %p173 = scmp.eq.s32.totalorder %s172, 0
    %s175 = sadd.s32 %s174, 1
    %s176 = scalar_select %p173, %s174, %s175
    %p179 = pneg %p173
    %p180 = scmp.eq.s32.totalorder %s12, 1
    %p181 = por %p179, %p180
    %p182 = scmp.ne.s32.totalorder %s174, %s177
    %p183 = scmp.eq.s32.totalorder %s12, 0
    %p184 = por %p182, %p183
    %p185 = scmp.ne.s32.totalorder %s174, %s177
    %p186 = scmp.eq.s32.totalorder %s17, 1
    %p187 = por %p185, %p186
    %p188 = scmp.ne.s32.totalorder %s177, %s178
    %p189 = scmp.eq.s32.totalorder %s17, 0
    %p190 = por %p188, %p189
    %p191 = scmp.ne.s32.totalorder %s177, %s178
    %p192 = scmp.eq.s32.totalorder %s18, 1
    %p193 = por %p191, %p192
    %p195 = scmp.ne.s32.totalorder %s178, %s194
    %p196 = scmp.eq.s32.totalorder %s18, 0
    %p197 = por %p195, %p196
    %p198 = scmp.le.s32.totalorder 1, %s12
    %p199 = scmp.lt.s32.totalorder %s12, 3
    %p200 = pnand %p198, %p199
    %p201 = pneg %p200
    // Predicated region
    $region9: #{conv2d_channel_forward.5} parent=5 // pred_check
      _
    $region10: #{conv2d_channel_forward.5} parent=5 // pred_check_branch
      %203 = sbr.rel (%p200) target = $region12
    $region11: #{conv2d_channel_forward.5} parent=5 // pred_region
      %s204 = ssub.s32 %s12, 1
      // Predicated region
      $region13: #{conv2d_channel_forward.5} parent=11 // pred_check
        %p205 = pneg %p73
      $region14: #{conv2d_channel_forward.5} parent=11 // pred_check_branch
        %207 = sbr.rel (%p205) target = $region16
      $region15: #{conv2d_channel_forward.5} parent=11 // pred_region
        _
      $region16: #{conv2d_channel_forward.5} parent=11 // pred_fallthru
        _
      // Predicated region
      $region17: #{conv2d_channel_forward.5} parent=11 // pred_check
        %p208 = pneg %p94
      $region18: #{conv2d_channel_forward.5} parent=11 // pred_check_branch
        %210 = sbr.rel (%p208) target = $region20
      $region19: #{conv2d_channel_forward.5} parent=11 // pred_region
        _
      $region20: #{conv2d_channel_forward.5} parent=11 // pred_fallthru
        _
      // Predicated region
      $region21: #{conv2d_channel_forward.5} parent=11 // pred_check
        %p211 = pneg %p115
      $region22: #{conv2d_channel_forward.5} parent=11 // pred_check_branch
        %213 = sbr.rel (%p211) target = $region24
      $region23: #{conv2d_channel_forward.5} parent=11 // pred_region
        _
      $region24: #{conv2d_channel_forward.5} parent=11 // pred_fallthru
        _
      // Predicated region
      $region25: #{conv2d_channel_forward.5} parent=11 // pred_check
        %p214 = pneg %p162
      $region26: #{conv2d_channel_forward.5} parent=11 // pred_check_branch
        %216 = sbr.rel (%p214) target = $region28
      $region27: #{conv2d_channel_forward.5} parent=11 // pred_region
        _
      $region28: #{conv2d_channel_forward.5} parent=11 // pred_fallthru
        _
    $region12: #{conv2d_channel_forward.5} parent=5 // pred_fallthru
      _
    %p217 = scmp.lt.s32.totalorder %s12, 2
    // Predicated region
    $region29: #{conv2d_channel_forward.5} parent=5 // pred_check
      %p218 = pneg %p217
    $region30: #{conv2d_channel_forward.5} parent=5 // pred_check_branch
      %220 = sbr.rel (%p218) target = $region32
    $region31: #{conv2d_channel_forward.5} parent=5 // pred_region
      // Predicated region
      $region33: #{conv2d_channel_forward.5} parent=31 // pred_check
        %p221 = pneg %p46
      $region34: #{conv2d_channel_forward.5} parent=31 // pred_check_branch
        %223 = sbr.rel (%p221) target = $region36
      $region35: #{conv2d_channel_forward.5} parent=31 // pred_region
        %s224 = smul.u32 2, %s20
        %p225 = scmp.lt.s32.totalorder %s19, 1
        %s226 = scalar_select %p225, %s19, 1
        %p227 = scmp.lt.s32.totalorder %s224, 1
        %s228 = scalar_select %p227, %s224, 1
        %s229 = smul.addr %s226, 2
        %s230 = sadd.s32 %s228, %s229
        %s231 = smul.addr %s230, 4
        %s232 = scalar_lea.vmem %s0, %s231
        %s233 = smul.u32 2, %s20
      $region36: #{conv2d_channel_forward.5} parent=31 // pred_fallthru
        _
      // Predicated region
      $region37: #{conv2d_channel_forward.5} parent=31 // pred_check
        %p234 = pneg %p135
      $region38: #{conv2d_channel_forward.5} parent=31 // pred_check_branch
        %236 = sbr.rel (%p234) target = $region40
      $region39: #{conv2d_channel_forward.5} parent=31 // pred_region
        %p237 = scmp.lt.s32.totalorder %s19, 1
        %s238 = scalar_select %p237, %s19, 1
        %s239 = smul.addr %s238, 2
        %s240 = smul.addr %s239, 8
        %s241 = scalar_lea.vmem %s4, %s240
      $region40: #{conv2d_channel_forward.5} parent=31 // pred_fallthru
        _
    $region32: #{conv2d_channel_forward.5} parent=5 // pred_fallthru
      _
    %p242 = scmp.le.s32.totalorder 1, %s12
    %p243 = scmp.lt.s32.totalorder %s12, 3
    %p244 = pnand %p242, %p243
    %p245 = pneg %p244
    // Predicated region
    $region41: #{conv2d_channel_forward.5} parent=5 // pred_check
      _
    $region42: #{conv2d_channel_forward.5} parent=5 // pred_check_branch
      %247 = sbr.rel (%p244) target = $region44
    $region43: #{conv2d_channel_forward.5} parent=5 // pred_region
      %s248 = ssub.s32 %s12, 1
      %s249 = smul.u32 2, %s22
      %p250 = scmp.lt.s32.totalorder %s21, 1
      %s251 = scalar_select %p250, %s21, 1
      %p252 = scmp.lt.s32.totalorder %s249, 1
      %s253 = scalar_select %p252, %s249, 1
      %s254 = smul.addr %s251, 2
      %s255 = sadd.s32 %s253, %s254
      %s256 = smul.addr %s255, 4
      %s257 = scalar_lea.vmem %s0, %s256
      %p258 = pneg %p52
      %p259 = pneg %p49
      %p260 = pneg %p73
      %p261 = pneg %p70
      %p262 = pneg %p94
      %p263 = pneg %p91
      %p264 = pneg %p115
      %p265 = pneg %p112
      %p266 = scmp.lt.s32.totalorder %s21, 1
      %s267 = scalar_select %p266, %s21, 1
      %s268 = smul.addr %s267, 2
      %s269 = smul.addr %s268, 8
      %s270 = scalar_lea.vmem %s4, %s269
      %p271 = pneg %p141
      %p272 = pneg %p138
      %p273 = pneg %p162
      %p274 = pneg %p159
      %p275 = pneg %p190
      %p276 = pneg %p187
      %s277 = smul.u32 2, %s22
      %p278 = scmp.lt.s32.totalorder %s21, 1
      %s279 = scalar_select %p278, %s21, 1
      %p280 = scmp.lt.s32.totalorder %s277, 1
      %s281 = scalar_select %p280, %s277, 1
      %s282 = smul.addr %s279, 4
      %s283 = sadd.s32 %s281, %s282
      %s284 = smul.addr %s283, 8
      %s285 = scalar_lea.vmem %s6, %s284
      %s286 = smul.u32 2, %s22
      %p287 = scmp.lt.s32.totalorder %s21, 1
      %s288 = scalar_select %p287, %s21, 1
      %p289 = scmp.lt.s32.totalorder %s286, 1
      %s290 = scalar_select %p289, %s286, 1
      %s291 = smul.addr %s288, 2
      %s292 = sadd.s32 %s290, %s291
      %s293 = smul.addr %s292, 4
      %s294 = scalar_lea.vmem %s0, %s293
      %s295 = smul.u32 2, %s22
      %p296 = scmp.lt.s32.totalorder %s21, 1
      %s297 = scalar_select %p296, %s21, 1
      %s298 = smul.addr %s297, 2
      %s299 = smul.addr %s298, 8
      %s300 = scalar_lea.vmem %s4, %s299
      %s301 = smul.u32 2, %s22
      %p302 = scmp.lt.s32.totalorder %s21, 1
      %s303 = scalar_select %p302, %s21, 1
      %p304 = scmp.lt.s32.totalorder %s301, 1
      %s305 = scalar_select %p304, %s301, 1
      %s306 = smul.addr %s303, 4
      %s307 = sadd.s32 %s305, %s306
      %s308 = smul.addr %s307, 8
      %s309 = scalar_lea.vmem %s6, %s308
      %s310 = smul.u32 2, %s22
      %v311 = vld [vmem:[%s294] sm:$0xff]
      %v312 = vld [vmem:[%s1] sm:$0xff]
      %v313 = vld [vmem:[%s1 + $0x8] sm:$0xff]
      %315 = vst [vmem:[#allocation1] ss:$2 sm:$0xff] %v311
      %v316 = vld.sshfl [vmem:[#allocation1] sm:$0xff pattern:$0x75316420]
      %v317 = vld.sshfl [vmem:[#allocation1 + $0x8] sm:$0xff pattern:$0x75316420]
      %vm318 = vcmask 31744
      %v320 = vsel %vm318, %v312, 0
      %v323 = vsel %vm318, %v313, 0
      %vm325 = vcmask 1043456
      %v326 = vsel %vm325, %v316, 0
      %v328 = vsel %vm325, %v317, 0
      %330 = vmatpush.msra.mxu0 0.0
      %331 = vmatpush.msra.mxu0 0.0
      %332 = vmatpush.msra.mxu0 0.0
      %333 = vmatpush.msra.mxu0 0.0
      %334 = vmatpush.msra.mxu0 0.0
      %335 = vmatpush.msra.mxu0 0.0
      %336 = vmatpush.msra.mxu0 0.0
      %337 = vmatpush.msra.mxu0 0.0
      %338 = vmatpush.msra.mxu0 0.0
      %339 = vmatpush.msra.mxu0 0.0
      %340 = vmatpush.msra.mxu0 0.0
      %341 = vmatpush.msra.mxu0 0.0
      %342 = vmatpush.msra.mxu0 0.0
      %343 = vmatpush.msra.mxu0 0.0
      %344 = vmatpush.msra.mxu0 0.0
      %v345 = vand.u32 %v326, 4294901760
      %346 = vmatpush.msra.mxu0 %v345
      %v347 = vand.u32 %v320, 4294901760
      %v348 = vsub.f32 %v320, %v347
      %v349 = vand.u32 %v348, 4294901760
      %v350 = vsub.f32 %v348, %v349
      %v351 = vand.u32 %v350, 4294901760
      %352 = vmatmul.f32.gmra.mxu0 %v351
      %v353 = vpop.f32.mrf.mxu0
      %v354 = vadd.f32 0.0, %v353
      %v355 = vand.u32 %v323, 4294901760
      %v356 = vsub.f32 %v323, %v355
      %v357 = vand.u32 %v356, 4294901760
      %v358 = vsub.f32 %v356, %v357
      %v359 = vand.u32 %v358, 4294901760
      %360 = vmatmul.f32.gmra.mxu0 %v359
      %v361 = vpop.f32.mrf.mxu0
      %v362 = vadd.f32 0.0, %v361
      %363 = vdwg.mxu0
      %364 = vmatpush.msra.mxu0 0.0
      %365 = vmatpush.msra.mxu0 0.0
      %366 = vmatpush.msra.mxu0 0.0
      %367 = vmatpush.msra.mxu0 0.0
      %368 = vmatpush.msra.mxu0 0.0
      %369 = vmatpush.msra.mxu0 0.0
      %370 = vmatpush.msra.mxu0 0.0
      %371 = vmatpush.msra.mxu0 0.0
      %372 = vmatpush.msra.mxu0 0.0
      %373 = vmatpush.msra.mxu0 0.0
      %374 = vmatpush.msra.mxu0 0.0
      %375 = vmatpush.msra.mxu0 0.0
      %376 = vmatpush.msra.mxu0 0.0
      %377 = vmatpush.msra.mxu0 0.0
      %378 = vmatpush.msra.mxu0 0.0
      %v379 = vand.u32 %v326, 4294901760
      %v380 = vsub.f32 %v326, %v379
      %v381 = vand.u32 %v380, 4294901760
      %v382 = vsub.f32 %v380, %v381
      %v383 = vand.u32 %v382, 4294901760
      %384 = vmatpush.msra.mxu0 %v383
      %v385 = vand.u32 %v320, 4294901760
      %386 = vmatmul.f32.gmra.mxu0 %v385
      %v387 = vpop.f32.mrf.mxu0
      %v388 = vadd.f32 %v354, %v387
      %v389 = vand.u32 %v323, 4294901760
      %390 = vmatmul.f32.gmra.mxu0 %v389
      %v391 = vpop.f32.mrf.mxu0
      %v392 = vadd.f32 %v362, %v391
      %393 = vdwg.mxu0
      %394 = vmatpush.msra.mxu0 0.0
      %395 = vmatpush.msra.mxu0 0.0
      %396 = vmatpush.msra.mxu0 0.0
      %397 = vmatpush.msra.mxu0 0.0
      %398 = vmatpush.msra.mxu0 0.0
      %399 = vmatpush.msra.mxu0 0.0
      %400 = vmatpush.msra.mxu0 0.0
      %401 = vmatpush.msra.mxu0 0.0
      %402 = vmatpush.msra.mxu0 0.0
      %403 = vmatpush.msra.mxu0 0.0
      %404 = vmatpush.msra.mxu0 0.0
      %405 = vmatpush.msra.mxu0 0.0
      %406 = vmatpush.msra.mxu0 0.0
      %407 = vmatpush.msra.mxu0 0.0
      %408 = vmatpush.msra.mxu0 0.0
      %v409 = vand.u32 %v326, 4294901760
      %v410 = vsub.f32 %v326, %v409
      %411 = vmatpush.msra.mxu0 %v410
      %v412 = vand.u32 %v320, 4294901760
      %v413 = vsub.f32 %v320, %v412
      %414 = vmatmul.f32.gmra.mxu0 %v413
      %v415 = vpop.f32.mrf.mxu0
      %v416 = vadd.f32 %v388, %v415
      %v417 = vand.u32 %v323, 4294901760
      %v418 = vsub.f32 %v323, %v417
      %419 = vmatmul.f32.gmra.mxu0 %v418
      %v420 = vpop.f32.mrf.mxu0
      %v421 = vadd.f32 %v392, %v420
      %422 = vdwg.mxu0
      %423 = vmatpush.msra.mxu0 0.0
      %424 = vmatpush.msra.mxu0 0.0
      %425 = vmatpush.msra.mxu0 0.0
      %426 = vmatpush.msra.mxu0 0.0
      %427 = vmatpush.msra.mxu0 0.0
      %428 = vmatpush.msra.mxu0 0.0
      %429 = vmatpush.msra.mxu0 0.0
      %430 = vmatpush.msra.mxu0 0.0
      %431 = vmatpush.msra.mxu0 0.0
      %432 = vmatpush.msra.mxu0 0.0
      %433 = vmatpush.msra.mxu0 0.0
      %434 = vmatpush.msra.mxu0 0.0
      %435 = vmatpush.msra.mxu0 0.0
      %436 = vmatpush.msra.mxu0 0.0
      %437 = vmatpush.msra.mxu0 0.0
      %v438 = vand.u32 %v326, 4294901760
      %439 = vmatpush.msra.mxu0 %v438
      %v440 = vand.u32 %v320, 4294901760
      %v441 = vsub.f32 %v320, %v440
      %v442 = vand.u32 %v441, 4294901760
      %443 = vmatmul.f32.gmra.mxu0 %v442
      %v444 = vpop.f32.mrf.mxu0
      %v445 = vadd.f32 %v416, %v444
      %v446 = vand.u32 %v323, 4294901760
      %v447 = vsub.f32 %v323, %v446
      %v448 = vand.u32 %v447, 4294901760
      %449 = vmatmul.f32.gmra.mxu0 %v448
      %v450 = vpop.f32.mrf.mxu0
      %v451 = vadd.f32 %v421, %v450
      %452 = vdwg.mxu0
      %453 = vmatpush.msra.mxu0 0.0
      %454 = vmatpush.msra.mxu0 0.0
      %455 = vmatpush.msra.mxu0 0.0
      %456 = vmatpush.msra.mxu0 0.0
      %457 = vmatpush.msra.mxu0 0.0
      %458 = vmatpush.msra.mxu0 0.0
      %459 = vmatpush.msra.mxu0 0.0
      %460 = vmatpush.msra.mxu0 0.0
      %461 = vmatpush.msra.mxu0 0.0
      %462 = vmatpush.msra.mxu0 0.0
      %463 = vmatpush.msra.mxu0 0.0
      %464 = vmatpush.msra.mxu0 0.0
      %465 = vmatpush.msra.mxu0 0.0
      %466 = vmatpush.msra.mxu0 0.0
      %467 = vmatpush.msra.mxu0 0.0
      %v468 = vand.u32 %v326, 4294901760
      %v469 = vsub.f32 %v326, %v468
      %v470 = vand.u32 %v469, 4294901760
      %471 = vmatpush.msra.mxu0 %v470
      %v472 = vand.u32 %v320, 4294901760
      %473 = vmatmul.f32.gmra.mxu0 %v472
      %v474 = vpop.f32.mrf.mxu0
      %v475 = vadd.f32 %v445, %v474
      %v476 = vand.u32 %v323, 4294901760
      %477 = vmatmul.f32.gmra.mxu0 %v476
      %v478 = vpop.f32.mrf.mxu0
      %v479 = vadd.f32 %v451, %v478
      %480 = vdwg.mxu0
      %481 = vmatpush.msra.mxu0 0.0
      %482 = vmatpush.msra.mxu0 0.0
      %483 = vmatpush.msra.mxu0 0.0
      %484 = vmatpush.msra.mxu0 0.0
      %485 = vmatpush.msra.mxu0 0.0
      %486 = vmatpush.msra.mxu0 0.0
      %487 = vmatpush.msra.mxu0 0.0
      %488 = vmatpush.msra.mxu0 0.0
      %489 = vmatpush.msra.mxu0 0.0
      %490 = vmatpush.msra.mxu0 0.0
      %491 = vmatpush.msra.mxu0 0.0
      %492 = vmatpush.msra.mxu0 0.0
      %493 = vmatpush.msra.mxu0 0.0
      %494 = vmatpush.msra.mxu0 0.0
      %495 = vmatpush.msra.mxu0 0.0
      %v496 = vand.u32 %v326, 4294901760
      %497 = vmatpush.msra.mxu0 %v496
      %v498 = vand.u32 %v320, 4294901760
      %499 = vmatmul.f32.gmra.mxu0 %v498
      %v500 = vpop.f32.mrf.mxu0
      %v501 = vadd.f32 %v475, %v500
      %v502 = vand.u32 %v323, 4294901760
      %503 = vmatmul.f32.gmra.mxu0 %v502
      %v504 = vpop.f32.mrf.mxu0
      %v505 = vadd.f32 %v479, %v504
      %506 = vdwg.mxu0
      %507 = vmatpush.msra.mxu0 0.0
      %508 = vmatpush.msra.mxu0 0.0
      %509 = vmatpush.msra.mxu0 0.0
      %510 = vmatpush.msra.mxu0 0.0
      %511 = vmatpush.msra.mxu0 0.0
      %512 = vmatpush.msra.mxu0 0.0
      %513 = vmatpush.msra.mxu0 0.0
      %514 = vmatpush.msra.mxu0 0.0
      %515 = vmatpush.msra.mxu0 0.0
      %516 = vmatpush.msra.mxu0 0.0
      %517 = vmatpush.msra.mxu0 0.0
      %518 = vmatpush.msra.mxu0 0.0
      %519 = vmatpush.msra.mxu0 0.0
      %520 = vmatpush.msra.mxu0 0.0
      %521 = vmatpush.msra.mxu0 0.0
      %v522 = vand.u32 %v328, 4294901760
      %523 = vmatpush.msra.mxu0 %v522
      %v524 = vand.u32 %v320, 4294901760
      %v525 = vsub.f32 %v320, %v524
      %v526 = vand.u32 %v525, 4294901760
      %v527 = vsub.f32 %v525, %v526
      %v528 = vand.u32 %v527, 4294901760
      %529 = vmatmul.f32.gmra.mxu0 %v528
      %v530 = vpop.f32.mrf.mxu0
      %v531 = vadd.f32 0.0, %v530
      %v532 = vand.u32 %v323, 4294901760
      %v533 = vsub.f32 %v323, %v532
      %v534 = vand.u32 %v533, 4294901760
      %v535 = vsub.f32 %v533, %v534
      %v536 = vand.u32 %v535, 4294901760
      %537 = vmatmul.f32.gmra.mxu0 %v536
      %v538 = vpop.f32.mrf.mxu0
      %v539 = vadd.f32 0.0, %v538
      %540 = vdwg.mxu0
      %541 = vmatpush.msra.mxu0 0.0
      %542 = vmatpush.msra.mxu0 0.0
      %543 = vmatpush.msra.mxu0 0.0
      %544 = vmatpush.msra.mxu0 0.0
      %545 = vmatpush.msra.mxu0 0.0
      %546 = vmatpush.msra.mxu0 0.0
      %547 = vmatpush.msra.mxu0 0.0
      %548 = vmatpush.msra.mxu0 0.0
      %549 = vmatpush.msra.mxu0 0.0
      %550 = vmatpush.msra.mxu0 0.0
      %551 = vmatpush.msra.mxu0 0.0
      %552 = vmatpush.msra.mxu0 0.0
      %553 = vmatpush.msra.mxu0 0.0
      %554 = vmatpush.msra.mxu0 0.0
      %555 = vmatpush.msra.mxu0 0.0
      %v556 = vand.u32 %v328, 4294901760
      %v557 = vsub.f32 %v328, %v556
      %v558 = vand.u32 %v557, 4294901760
      %v559 = vsub.f32 %v557, %v558
      %v560 = vand.u32 %v559, 4294901760
      %561 = vmatpush.msra.mxu0 %v560
      %v562 = vand.u32 %v320, 4294901760
      %563 = vmatmul.f32.gmra.mxu0 %v562
      %v564 = vpop.f32.mrf.mxu0
      %v565 = vadd.f32 %v531, %v564
      %v566 = vand.u32 %v323, 4294901760
      %567 = vmatmul.f32.gmra.mxu0 %v566
      %v568 = vpop.f32.mrf.mxu0
      %v569 = vadd.f32 %v539, %v568
      %570 = vdwg.mxu0
      %571 = vmatpush.msra.mxu0 0.0
      %572 = vmatpush.msra.mxu0 0.0
      %573 = vmatpush.msra.mxu0 0.0
      %574 = vmatpush.msra.mxu0 0.0
      %575 = vmatpush.msra.mxu0 0.0
      %576 = vmatpush.msra.mxu0 0.0
      %577 = vmatpush.msra.mxu0 0.0
      %578 = vmatpush.msra.mxu0 0.0
      %579 = vmatpush.msra.mxu0 0.0
      %580 = vmatpush.msra.mxu0 0.0
      %581 = vmatpush.msra.mxu0 0.0
      %582 = vmatpush.msra.mxu0 0.0
      %583 = vmatpush.msra.mxu0 0.0
      %584 = vmatpush.msra.mxu0 0.0
      %585 = vmatpush.msra.mxu0 0.0
      %v586 = vand.u32 %v328, 4294901760
      %v587 = vsub.f32 %v328, %v586
      %588 = vmatpush.msra.mxu0 %v587
      %v589 = vand.u32 %v320, 4294901760
      %v590 = vsub.f32 %v320, %v589
      %591 = vmatmul.f32.gmra.mxu0 %v590
      %v592 = vpop.f32.mrf.mxu0
      %v593 = vadd.f32 %v565, %v592
      %v594 = vand.u32 %v323, 4294901760
      %v595 = vsub.f32 %v323, %v594
      %596 = vmatmul.f32.gmra.mxu0 %v595
      %v597 = vpop.f32.mrf.mxu0
      %v598 = vadd.f32 %v569, %v597
      %599 = vdwg.mxu0
      %600 = vmatpush.msra.mxu0 0.0
      %601 = vmatpush.msra.mxu0 0.0
      %602 = vmatpush.msra.mxu0 0.0
      %603 = vmatpush.msra.mxu0 0.0
      %604 = vmatpush.msra.mxu0 0.0
      %605 = vmatpush.msra.mxu0 0.0
      %606 = vmatpush.msra.mxu0 0.0
      %607 = vmatpush.msra.mxu0 0.0
      %608 = vmatpush.msra.mxu0 0.0
      %609 = vmatpush.msra.mxu0 0.0
      %610 = vmatpush.msra.mxu0 0.0
      %611 = vmatpush.msra.mxu0 0.0
      %612 = vmatpush.msra.mxu0 0.0
      %613 = vmatpush.msra.mxu0 0.0
      %614 = vmatpush.msra.mxu0 0.0
      %v615 = vand.u32 %v328, 4294901760
      %616 = vmatpush.msra.mxu0 %v615
      %v617 = vand.u32 %v320, 4294901760
      %v618 = vsub.f32 %v320, %v617
      %v619 = vand.u32 %v618, 4294901760
      %620 = vmatmul.f32.gmra.mxu0 %v619
      %v621 = vpop.f32.mrf.mxu0
      %v622 = vadd.f32 %v593, %v621
      %v623 = vand.u32 %v323, 4294901760
      %v624 = vsub.f32 %v323, %v623
      %v625 = vand.u32 %v624, 4294901760
      %626 = vmatmul.f32.gmra.mxu0 %v625
      %v627 = vpop.f32.mrf.mxu0
      %v628 = vadd.f32 %v598, %v627
      %629 = vdwg.mxu0
      %630 = vmatpush.msra.mxu0 0.0
      %631 = vmatpush.msra.mxu0 0.0
      %632 = vmatpush.msra.mxu0 0.0
      %633 = vmatpush.msra.mxu0 0.0
      %634 = vmatpush.msra.mxu0 0.0
      %635 = vmatpush.msra.mxu0 0.0
      %636 = vmatpush.msra.mxu0 0.0
      %637 = vmatpush.msra.mxu0 0.0
      %638 = vmatpush.msra.mxu0 0.0
      %639 = vmatpush.msra.mxu0 0.0
      %640 = vmatpush.msra.mxu0 0.0
      %641 = vmatpush.msra.mxu0 0.0
      %642 = vmatpush.msra.mxu0 0.0
      %643 = vmatpush.msra.mxu0 0.0
      %644 = vmatpush.msra.mxu0 0.0
      %v645 = vand.u32 %v328, 4294901760
      %v646 = vsub.f32 %v328, %v645
      %v647 = vand.u32 %v646, 4294901760
      %648 = vmatpush.msra.mxu0 %v647
      %v649 = vand.u32 %v320, 4294901760
      %650 = vmatmul.f32.gmra.mxu0 %v649
      %v651 = vpop.f32.mrf.mxu0
      %v652 = vadd.f32 %v622, %v651
      %v653 = vand.u32 %v323, 4294901760
      %654 = vmatmul.f32.gmra.mxu0 %v653
      %v655 = vpop.f32.mrf.mxu0
      %v656 = vadd.f32 %v628, %v655
      %657 = vdwg.mxu0
      %658 = vmatpush.msra.mxu0 0.0
      %659 = vmatpush.msra.mxu0 0.0
      %660 = vmatpush.msra.mxu0 0.0
      %661 = vmatpush.msra.mxu0 0.0
      %662 = vmatpush.msra.mxu0 0.0
      %663 = vmatpush.msra.mxu0 0.0
      %664 = vmatpush.msra.mxu0 0.0
      %665 = vmatpush.msra.mxu0 0.0
      %666 = vmatpush.msra.mxu0 0.0
      %667 = vmatpush.msra.mxu0 0.0
      %668 = vmatpush.msra.mxu0 0.0
      %669 = vmatpush.msra.mxu0 0.0
      %670 = vmatpush.msra.mxu0 0.0
      %671 = vmatpush.msra.mxu0 0.0
      %672 = vmatpush.msra.mxu0 0.0
      %v673 = vand.u32 %v328, 4294901760
      %674 = vmatpush.msra.mxu0 %v673
      %v675 = vand.u32 %v320, 4294901760
      %676 = vmatmul.f32.gmra.mxu0 %v675
      %v677 = vpop.f32.mrf.mxu0
      %v678 = vadd.f32 %v652, %v677
      %v679 = vand.u32 %v323, 4294901760
      %680 = vmatmul.f32.gmra.mxu0 %v679
      %v681 = vpop.f32.mrf.mxu0
      %v682 = vadd.f32 %v656, %v681
      %683 = vdwg.mxu0
      %v684 = vld [vmem:[%s2] sm:$0xff]
      %v685 = vld [vmem:[%s2 + $0x8] sm:$0xff]
      %687 = vset.pattern.permute.xlu0 0
      %688 = vperm.xlu0 %687, %v684
      %v689 = vpop.permute.xlu0 %688
      %692 = vset.pattern.permute.xlu0 0
      %693 = vperm.xlu0 %692, %v685
      %v694 = vpop.permute.xlu0 %693
      %v696 = vmul.f32 %v501, %v689
      %v697 = vmul.f32 %v678, %v689
      %v698 = vmul.f32 %v505, %v694
      %v699 = vmul.f32 %v682, %v694
      %v700 = vld [vmem:[%s3] sm:$0xff]
      %v701 = vld [vmem:[%s3 + $0x8] sm:$0xff]
      %703 = vset.pattern.permute.xlu0 0
      %704 = vperm.xlu0 %703, %v700
      %v705 = vpop.permute.xlu0 %704
      %708 = vset.pattern.permute.xlu0 0
      %709 = vperm.xlu0 %708, %v701
      %v710 = vpop.permute.xlu0 %709
      %v712 = vadd.f32 %v696, %v705
      %v713 = vadd.f32 %v697, %v705
      %v714 = vadd.f32 %v698, %v710
      %v715 = vadd.f32 %v699, %v710
      %vm716 = vcmp.ge.f32.partialorder %v712, 0.0
      %vm717 = vcmp.ge.f32.partialorder %v713, 0.0
      %vm718 = vcmp.ge.f32.partialorder %v714, 0.0
      %vm719 = vcmp.ge.f32.partialorder %v715, 0.0
      %v720 = vmul.f32 %v712, 0.01
      %v721 = vmul.f32 %v713, 0.01
      %v722 = vmul.f32 %v714, 0.01
      %v723 = vmul.f32 %v715, 0.01
      %v724 = vsel %vm716, %v712, %v720
      %v725 = vsel %vm717, %v713, %v721
      %v726 = vsel %vm718, %v714, %v722
      %v727 = vsel %vm719, %v715, %v723
      %v728 = vld [vmem:[%s300] sm:$0xff]
      %v729 = vld [vmem:[%s300 + $0x8] sm:$0xff]
      %731 = vset.pattern.permute.xlu0 0
      %732 = vperm.xlu0 %731, %v728
      %v733 = vpop.permute.xlu0 %732
      %736 = vset.pattern.permute.xlu0 0
      %737 = vperm.xlu0 %736, %v729
      %v738 = vpop.permute.xlu0 %737
      %v740 = vmul.f32 %v724, %v733
      %v741 = vmul.f32 %v725, %v733
      %v742 = vmul.f32 %v726, %v738
      %v743 = vmul.f32 %v727, %v738
      %v744 = vld [vmem:[%s5] sm:$0xff]
      %v745 = vld [vmem:[%s5 + $0x8] sm:$0xff]
      %747 = vset.pattern.permute.xlu0 0
      %748 = vperm.xlu0 %747, %v744
      %v749 = vpop.permute.xlu0 %748
      %752 = vset.pattern.permute.xlu0 0
      %753 = vperm.xlu0 %752, %v745
      %v754 = vpop.permute.xlu0 %753
      %v756 = vadd.f32 %v740, %v749
      %v757 = vadd.f32 %v741, %v749
      %v758 = vadd.f32 %v742, %v754
      %v759 = vadd.f32 %v743, %v754
      %vm760 = vcmp.ge.f32.partialorder %v756, 0.0
      %vm761 = vcmp.ge.f32.partialorder %v757, 0.0
      %vm762 = vcmp.ge.f32.partialorder %v758, 0.0
      %vm763 = vcmp.ge.f32.partialorder %v759, 0.0
      %v764 = vmul.f32 %v756, 0.01
      %v765 = vmul.f32 %v757, 0.01
      %v766 = vmul.f32 %v758, 0.01
      %v767 = vmul.f32 %v759, 0.01
      %v768 = vsel %vm760, %v756, %v764
      %v769 = vsel %vm761, %v757, %v765
      %v770 = vsel %vm762, %v758, %v766
      %v771 = vsel %vm763, %v759, %v767
      %772 = vst [vmem:[%s309] sm:$0xff] %v768
      %773 = vst [vmem:[%s309 + $0x8] sm:$0xff] %v769
      %774 = vst [vmem:[%s309 + $0x10] sm:$0xff] %v770
      %775 = vst [vmem:[%s309 + $0x18] sm:$0xff] %v771
      %s776 = smul.u32 2, %s22
      %p777 = scmp.lt.s32.totalorder %s21, 1
      %s778 = scalar_select %p777, %s21, 1
      %p779 = scmp.lt.s32.totalorder %s776, 1
      %s780 = scalar_select %p779, %s776, 1
      %s781 = smul.addr %s778, 4
      %s782 = sadd.s32 %s780, %s781
      %s783 = smul.addr %s782, 8
      %s784 = scalar_lea.vmem %s6, %s783
      // Predicated region
      $region45: #{conv2d_channel_forward.5} parent=43 // pred_check
        %p785 = pneg %p187
      $region46: #{conv2d_channel_forward.5} parent=43 // pred_check_branch
        %787 = sbr.rel (%p785) target = $region48
      $region47: #{conv2d_channel_forward.5} parent=43 // pred_region
        %s788 = smul.u32 2, %s22
      $region48: #{conv2d_channel_forward.5} parent=43 // pred_fallthru
        _
    $region44: #{conv2d_channel_forward.5} parent=5 // pred_fallthru
      _
    %p789 = scmp.le.s32.totalorder 2, %s12
    // Predicated region
    $region49: #{conv2d_channel_forward.5} parent=5 // pred_check
      %p790 = pneg %p789
    $region50: #{conv2d_channel_forward.5} parent=5 // pred_check_branch
      %792 = sbr.rel (%p790) target = $region52
    $region51: #{conv2d_channel_forward.5} parent=5 // pred_region
      %s793 = ssub.s32 %s12, 2
      // Predicated region
      $region53: #{conv2d_channel_forward.5} parent=51 // pred_check
        %p794 = pneg %p193
      $region54: #{conv2d_channel_forward.5} parent=51 // pred_check_branch
        %796 = sbr.rel (%p794) target = $region56
      $region55: #{conv2d_channel_forward.5} parent=51 // pred_region
        %s797 = smul.u32 2, %s24
        %p798 = scmp.lt.s32.totalorder %s23, 1
        %s799 = scalar_select %p798, %s23, 1
        %p800 = scmp.lt.s32.totalorder %s797, 1
        %s801 = scalar_select %p800, %s797, 1
        %s802 = smul.addr %s799, 4
        %s803 = sadd.s32 %s801, %s802
        %s804 = smul.addr %s803, 8
        %s805 = scalar_lea.vmem %s6, %s804
      $region56: #{conv2d_channel_forward.5} parent=51 // pred_fallthru
        _
    $region52: #{conv2d_channel_forward.5} parent=5 // pred_fallthru
      _
  $region6: #{conv2d_channel_forward.5} parent=0 // loop_footer
    %s16 = sadd.s32 1, %s12
  $region7: #{conv2d_channel_forward.5} parent=0 // loop_footer_branch
    %11 = sbr.rel target = $region3
  $region8: #{conv2d_channel_forward.5} parent=0 // loop_exit
    _

</llo_original>
